<compile_context>
chip_gen: v7x
topology: tpu7x:2x2x1
jax: 0.10.0
libtpu: 0.0.40
codegen_flags: <defaults>
</compile_context>

<pallas_src>
import functools

import jax
import jax.numpy as jnp
from jax.experimental import pallas as pl
from jax.experimental.pallas import tpu as pltpu

LIFT = 20  # out_features of the lifting Linear(1, 20)


def _silu(x):
    # x * sigmoid(x) with the transcendental on the EUP (tanh identity),
    # instead of exp + divide occupying VALU bundles.  Mathematically exact.
    return x * (0.5 * jnp.tanh(0.5 * x) + 0.5)


def _round_up(n, m):
    return -(-n // m) * m


def _pack_params(p, parameters_dimension, noise_dimension, input_dimension):
    """Pack all (expanded) weights into one f32 blob with 8-aligned row blocks."""
    P, N, D = parameters_dimension, noise_dimension, input_dimension
    D6, D3, L = D // 6, D // 3, LIFT
    f32 = jnp.float32

    cw1 = jnp.asarray(p["cw1"], f32)          # (P, 2N)
    cb1 = jnp.asarray(p["cb1"], f32)          # (1, 2N)
    cw2 = jnp.asarray(p["cw2"], f32)          # (2N, 5N)
    cb2 = jnp.asarray(p["cb2"], f32)          # (1, 5N)
    mw1 = jnp.asarray(p["mw1"], f32)          # (6N, D6)
    mb1 = jnp.asarray(p["mb1"], f32)          # (1, D6)
    mw2 = jnp.asarray(p["mw2"], f32)          # (D6, D3)
    mb2 = jnp.asarray(p["mb2"], f32)          # (1, D3)
    mw3 = jnp.asarray(p["mw3"], f32)          # (D3, D)
    mb3 = jnp.asarray(p["mb3"], f32)          # (1, D)
    lw = jnp.asarray(p["lw"], f32).reshape(L)
    lb = jnp.asarray(p["lb"], f32).reshape(L)

    # --- lane-flattened lift: W1_exp[i, j*D6 + k] = mw1[i, k] * lw[j] -------
    w1_exp = (lw[None, :, None] * mw1[:, None, :]).reshape(6 * N, L * D6)
    w1z, w1c = w1_exp[:N], w1_exp[N:]         # rows hit by z / by condition
    # lifting bias folded into layer-1 bias: lb[j]*colsum(mw1)[k] + mb1[k]
    b1 = (lb[:, None] * mw1.sum(axis=0)[None, :] + mb1).reshape(1, L * D6)
    # fold z -> 2z-1 into the weights:  (2z-1)@w1z == z@(2*w1z) - colsum(w1z)
    b1 = b1 - w1z.sum(axis=0, keepdims=True)
    # input is x = [param | z]; zero-pad so both first-layer matmuls take x
    cw1x = jnp.concatenate([cw1, jnp.zeros((N, 2 * N), f32)], axis=0)        # (P+N, 2N)
    w1x = jnp.concatenate([jnp.zeros((P, L * D6), f32), 2.0 * w1z], axis=0)  # (P+N, L*D6)

    # --- block-diagonal expansion of layers 2/3 (weights shared across j) ---
    eye = jnp.eye(L, dtype=f32)
    w2 = jnp.kron(eye, mw2)                   # (L*D6, L*D3)
    b2 = jnp.tile(mb2, (1, L))                # (1, L*D3)
    w3 = jnp.kron(eye, mw3)                   # (L*D3, L*D)
    b3 = jnp.tile(mb3, (1, L))                # (1, L*D)

    blocks = [
        ("cw1x", cw1x), ("cb1", cb1), ("cw2", cw2), ("cb2", cb2),
        ("w1x", w1x), ("w1c", w1c), ("b1", b1),
        ("w2", w2), ("b2", b2), ("w3", w3), ("b3", b3),
    ]
    wmax = max(a.shape[1] for _, a in blocks)
    offsets, rows, padded = {}, 0, []
    for name, arr in blocks:
        r, c = arr.shape
        # review correctness concern: offsets must stay 8-aligned & in-bounds
        assert rows % 8 == 0 and c <= wmax, (name, rows, c, wmax)
        offsets[name] = rows
        rp = _round_up(r, 8)
        padded.append(jnp.zeros((rp, wmax), f32).at[:r, :c].set(arr))
        rows += rp
    blob = jnp.concatenate(padded, axis=0)
    assert blob.shape == (rows, wmax)
    return blob, offsets


def _generator_kernel(x_ref, blob_ref, out_ref, *, offs, P, N, D):
    D6, D3, L = D // 6, D // 3, LIFT

    def w(name, rows, cols):                  # static ref view into the blob
        o = offs[name]
        return blob_ref[o:o + rows, :cols]

    dot = functools.partial(jnp.dot, preferred_element_type=jnp.float32)
    x = x_ref[...]                            # (B, P+N) = [param | z]

    # condition network: Linear(P,2N) -> SiLU -> Linear(2N,5N)
    h = _silu(dot(x, w("cw1x", P + N, 2 * N)) + w("cb1", 1, 2 * N))
    cond = dot(h, w("cw2", 2 * N, 5 * N)) + w("cb2", 1, 5 * N)

    # lifting + model layer 1, flattened over the 20 lift channels in lanes.
    # (Optional v6e variant: concat(z2, cond) and a single matmul; kept as two
    #  matmuls against the split expanded weights for simplicity.)
    pre1 = (dot(x, w("w1x", P + N, L * D6))
            + dot(cond, w("w1c", 5 * N, L * D6))
            + w("b1", 1, L * D6))
    h1 = _silu(pre1)                                                   # (B, L*D6)
    # model layers 2/3 via block-diagonal (weight-shared) expansions
    h2 = _silu(dot(h1, w("w2", L * D6, L * D3)) + w("b2", 1, L * D3))  # (B, L*D3)
    y = dot(h2, w("w3", L * D3, L * D)) + w("b3", 1, L * D)            # (B, L*D)

    out_ref[...] = y.astype(out_ref.dtype)    # lane-dense unmasked store


def make_generator_forward(p, parameters_dimension, noise_dimension,
                           input_dimension):
    """Pack weights once; returns a jitted forward(param, z) -> (B, 20, D)."""
    P, N, D = parameters_dimension, noise_dimension, input_dimension
    D6, D3, L = D // 6, D // 3, LIFT
    blob, offs = _pack_params(p, P, N, D)     # cached across forward calls
    kernel = functools.partial(_generator_kernel, offs=offs, P=P, N=N, D=D)
    vmem = pl.BlockSpec(memory_space=pltpu.MemorySpace.VMEM)

    @jax.jit
    def forward(param, z):
        B = param.shape[0]
        x = jnp.concatenate([param.astype(jnp.float32),
                             z.astype(jnp.float32)], axis=-1)   # one input DMA
        flops = 2 * B * ((P + N) * 2 * N + 2 * N * 5 * N + (P + N) * L * D6
                         + 5 * N * L * D6 + (L * D6) * (L * D3)
                         + (L * D3) * (L * D))
        transc = B * (2 * N + L * D6 + L * D3)
        bytes_acc = 4 * (x.size + blob.size + B * L * D)
        out = pl.pallas_call(
            kernel,
            out_shape=jax.ShapeDtypeStruct((B, L * D), jnp.float32),
            in_specs=[vmem, vmem],
            out_specs=vmem,
            cost_estimate=pl.CostEstimate(flops=flops, transcendentals=transc,
                                          bytes_accessed=bytes_acc),
            # No grid: at B=4 per-step grid overhead exceeds the work.
            # TODO(synk): on v7x, add a "parallel" grid over B once batch
            # grows so the second TensorCore isn't idle.
        )(x, blob)
        return out.reshape(B, L, D)           # free metadata view
    return forward


def generator_reference(param, z, p):
    """Pure-JAX reference mirroring the PyTorch forward exactly."""
    zz = 2.0 * z - 1.0
    h = jax.nn.silu(param @ p["cw1"] + p["cb1"])
    cond = h @ p["cw2"] + p["cb2"]
    inp = jnp.concatenate([zz, cond], axis=-1)                       # (B, 6N)
    lifted = inp[:, :, None] * p["lw"].reshape(1, 1, LIFT) + p["lb"].reshape(1, 1, LIFT)
    x = jnp.transpose(lifted, (0, 2, 1))                             # (B, 20, 6N)
    h1 = jax.nn.silu(x @ p["mw1"] + p["mb1"])
    h2 = jax.nn.silu(h1 @ p["mw2"] + p["mb2"])
    return h2 @ p["mw3"] + p["mb3"]


def _linear_init(key, fan_in, fan_out, dtype=jnp.float32):
    # PyTorch default nn.Linear init: U(-1/sqrt(fan_in), 1/sqrt(fan_in)).
    kw, kb = jax.random.split(key)
    bound = 1.0 / jnp.sqrt(jnp.asarray(fan_in, dtype))
    w = jax.random.uniform(kw, (fan_in, fan_out), dtype, -bound, bound)
    b = jax.random.uniform(kb, (1, fan_out), dtype, -bound, bound)
    return w, b


def make_params(key, input_dimension, parameters_dimension, noise_dimension):
    D, P, N = input_dimension, parameters_dimension, noise_dimension
    keys = jax.random.split(key, 6)
    p = {}
    p["lw"], p["lb"] = _linear_init(keys[0], 1, LIFT)          # lifting Linear(1, 20)
    p["mw1"], p["mb1"] = _linear_init(keys[1], 6 * N, D // 6)  # model
    p["mw2"], p["mb2"] = _linear_init(keys[2], D // 6, D // 3)
    p["mw3"], p["mb3"] = _linear_init(keys[3], D // 3, D)
    p["cw1"], p["cb1"] = _linear_init(keys[4], P, 2 * N)       # condition
    p["cw2"], p["cb2"] = _linear_init(keys[5], 2 * N, 5 * N)
    return p


if __name__ == "__main__":
    B = 4                 # batch
    P = 4                 # parameters_dimension
    N = 8                 # noise_dimension
    D = 48                # input_dimension (divisible by 6)

    root = jax.random.PRNGKey(0)
    k_params, k_param_in, k_noise = jax.random.split(root, 3)

    params = make_params(k_params, D, P, N)
    param_in = jax.random.normal(k_param_in, (B, P), jnp.float32)
    # TODO(synk): torch.rand's in-forward RNG stream cannot be reproduced
    # bit-exactly; z is drawn with jax.random (same U[0,1) distribution).
    z = jax.random.uniform(k_noise, (B, N), jnp.float32)

    forward = make_generator_forward(params, P, N, D)   # packs weights once
    out = jax.block_until_ready(forward(param_in, z))

    ref = generator_reference(param_in, z, params)
    assert out.shape == (B, LIFT, D), out.shape
    err = float(jnp.max(jnp.abs(out - ref)))
    assert jnp.allclose(out, ref, atol=5e-4, rtol=5e-4), err
    print("KERNEL_OK")
</pallas_src>

<mosaic_0001>
module attributes {stable_mosaic.version = 11 : i64} {
  func.func @_generator_kernel(%arg0: memref<4x12xf32, #tpu.memory_space<vmem>>, %arg1: memref<608x960xf32, #tpu.memory_space<vmem>>, %arg2: memref<4x960xf32, #tpu.memory_space<vmem>>) attributes {dimension_semantics = [], scalar_prefetch = 0 : i64, scratch_operands = 0 : i64, tpu.core_type = #tpu.core_type<tc>} {
    %c0 = arith.constant 0 : index
    %c0_0 = arith.constant 0 : index
    %0 = vector.load %arg0[%c0, %c0_0] : memref<4x12xf32, #tpu.memory_space<vmem>>, vector<4x12xf32>
    %c0_1 = arith.constant 0 : index
    %c0_2 = arith.constant 0 : index
    %1 = vector.load %arg1[%c0_1, %c0_2] : memref<608x960xf32, #tpu.memory_space<vmem>>, vector<12x16xf32>
    %cst = arith.constant dense<0.000000e+00> : vector<4x16xf32>
    %2 = tpu.matmul %0, %1, %cst {dimension_numbers = #tpu.dot_dimension_numbers<[1], [0], [0], [1], [0, 0, 1, 1], [], []>} : vector<4x12xf32>, vector<12x16xf32>, vector<4x16xf32> -> vector<4x16xf32>
    %c16 = arith.constant 16 : index
    %c0_3 = arith.constant 0 : index
    %3 = vector.load %arg1[%c16, %c0_3] : memref<608x960xf32, #tpu.memory_space<vmem>>, vector<1x16xf32>
    %4 = vector.broadcast %3 : vector<1x16xf32> to vector<4x16xf32>
    %5 = arith.addf %2, %4 : vector<4x16xf32>
    %cst_4 = arith.constant 5.000000e-01 : f32
    %6 = vector.broadcast %cst_4 : f32 to vector<4x16xf32>
    %7 = arith.mulf %6, %5 : vector<4x16xf32>
    %8 = math.tanh %7 : vector<4x16xf32>
    %cst_5 = arith.constant 5.000000e-01 : f32
    %9 = vector.broadcast %cst_5 : f32 to vector<4x16xf32>
    %10 = arith.mulf %9, %8 : vector<4x16xf32>
    %cst_6 = arith.constant 5.000000e-01 : f32
    %11 = vector.broadcast %cst_6 : f32 to vector<4x16xf32>
    %12 = arith.addf %10, %11 : vector<4x16xf32>
    %13 = arith.mulf %5, %12 : vector<4x16xf32>
    %c24 = arith.constant 24 : index
    %c0_7 = arith.constant 0 : index
    %14 = vector.load %arg1[%c24, %c0_7] : memref<608x960xf32, #tpu.memory_space<vmem>>, vector<16x40xf32>
    %cst_8 = arith.constant dense<0.000000e+00> : vector<4x40xf32>
    %15 = tpu.matmul %13, %14, %cst_8 {dimension_numbers = #tpu.dot_dimension_numbers<[1], [0], [0], [1], [0, 0, 1, 1], [], []>} : vector<4x16xf32>, vector<16x40xf32>, vector<4x40xf32> -> vector<4x40xf32>
    %c40 = arith.constant 40 : index
    %c0_9 = arith.constant 0 : index
    %16 = vector.load %arg1[%c40, %c0_9] : memref<608x960xf32, #tpu.memory_space<vmem>>, vector<1x40xf32>
    %17 = vector.broadcast %16 : vector<1x40xf32> to vector<4x40xf32>
    %18 = arith.addf %15, %17 : vector<4x40xf32>
    %c48 = arith.constant 48 : index
    %c0_10 = arith.constant 0 : index
    %19 = vector.load %arg1[%c48, %c0_10] : memref<608x960xf32, #tpu.memory_space<vmem>>, vector<12x160xf32>
    %cst_11 = arith.constant dense<0.000000e+00> : vector<4x160xf32>
    %20 = tpu.matmul %0, %19, %cst_11 {dimension_numbers = #tpu.dot_dimension_numbers<[1], [0], [0], [1], [0, 0, 1, 1], [], []>} : vector<4x12xf32>, vector<12x160xf32>, vector<4x160xf32> -> vector<4x160xf32>
    %c64 = arith.constant 64 : index
    %c0_12 = arith.constant 0 : index
    %21 = vector.load %arg1[%c64, %c0_12] : memref<608x960xf32, #tpu.memory_space<vmem>>, vector<40x160xf32>
    %cst_13 = arith.constant dense<0.000000e+00> : vector<4x160xf32>
    %22 = tpu.matmul %18, %21, %cst_13 {dimension_numbers = #tpu.dot_dimension_numbers<[1], [0], [0], [1], [0, 0, 1, 1], [], []>} : vector<4x40xf32>, vector<40x160xf32>, vector<4x160xf32> -> vector<4x160xf32>
    %23 = arith.addf %20, %22 : vector<4x160xf32>
    %c104 = arith.constant 104 : index
    %c0_14 = arith.constant 0 : index
    %24 = vector.load %arg1[%c104, %c0_14] : memref<608x960xf32, #tpu.memory_space<vmem>>, vector<1x160xf32>
    %25 = vector.broadcast %24 : vector<1x160xf32> to vector<4x160xf32>
    %26 = arith.addf %23, %25 : vector<4x160xf32>
    %cst_15 = arith.constant 5.000000e-01 : f32
    %27 = vector.broadcast %cst_15 : f32 to vector<4x160xf32>
    %28 = arith.mulf %27, %26 : vector<4x160xf32>
    %29 = math.tanh %28 : vector<4x160xf32>
    %cst_16 = arith.constant 5.000000e-01 : f32
    %30 = vector.broadcast %cst_16 : f32 to vector<4x160xf32>
    %31 = arith.mulf %30, %29 : vector<4x160xf32>
    %cst_17 = arith.constant 5.000000e-01 : f32
    %32 = vector.broadcast %cst_17 : f32 to vector<4x160xf32>
    %33 = arith.addf %31, %32 : vector<4x160xf32>
    %34 = arith.mulf %26, %33 : vector<4x160xf32>
    %c112 = arith.constant 112 : index
    %c0_18 = arith.constant 0 : index
    %35 = vector.load %arg1[%c112, %c0_18] : memref<608x960xf32, #tpu.memory_space<vmem>>, vector<160x320xf32>
    %cst_19 = arith.constant dense<0.000000e+00> : vector<4x320xf32>
    %36 = tpu.matmul %34, %35, %cst_19 {dimension_numbers = #tpu.dot_dimension_numbers<[1], [0], [0], [1], [0, 0, 1, 1], [], []>} : vector<4x160xf32>, vector<160x320xf32>, vector<4x320xf32> -> vector<4x320xf32>
    %c272 = arith.constant 272 : index
    %c0_20 = arith.constant 0 : index
    %37 = vector.load %arg1[%c272, %c0_20] : memref<608x960xf32, #tpu.memory_space<vmem>>, vector<1x320xf32>
    %38 = vector.broadcast %37 : vector<1x320xf32> to vector<4x320xf32>
    %39 = arith.addf %36, %38 : vector<4x320xf32>
    %cst_21 = arith.constant 5.000000e-01 : f32
    %40 = vector.broadcast %cst_21 : f32 to vector<4x320xf32>
    %41 = arith.mulf %40, %39 : vector<4x320xf32>
    %42 = math.tanh %41 : vector<4x320xf32>
    %cst_22 = arith.constant 5.000000e-01 : f32
    %43 = vector.broadcast %cst_22 : f32 to vector<4x320xf32>
    %44 = arith.mulf %43, %42 : vector<4x320xf32>
    %cst_23 = arith.constant 5.000000e-01 : f32
    %45 = vector.broadcast %cst_23 : f32 to vector<4x320xf32>
    %46 = arith.addf %44, %45 : vector<4x320xf32>
    %47 = arith.mulf %39, %46 : vector<4x320xf32>
    %c280 = arith.constant 280 : index
    %c0_24 = arith.constant 0 : index
    %48 = vector.load %arg1[%c280, %c0_24] : memref<608x960xf32, #tpu.memory_space<vmem>>, vector<320x960xf32>
    %cst_25 = arith.constant dense<0.000000e+00> : vector<4x960xf32>
    %49 = tpu.matmul %47, %48, %cst_25 {dimension_numbers = #tpu.dot_dimension_numbers<[1], [0], [0], [1], [0, 0, 1, 1], [], []>} : vector<4x320xf32>, vector<320x960xf32>, vector<4x960xf32> -> vector<4x960xf32>
    %c600 = arith.constant 600 : index
    %c0_26 = arith.constant 0 : index
    %50 = vector.load %arg1[%c600, %c0_26] : memref<608x960xf32, #tpu.memory_space<vmem>>, vector<1x960xf32>
    %51 = vector.broadcast %50 : vector<1x960xf32> to vector<4x960xf32>
    %52 = arith.addf %49, %51 : vector<4x960xf32>
    %c0_27 = arith.constant 0 : index
    %c0_28 = arith.constant 0 : index
    %53 = vector.load %arg2[%c0_27, %c0_28] : memref<4x960xf32, #tpu.memory_space<vmem>>, vector<4x960xf32>
    tpu.vector_store %arg2[%c0_27, %c0_28], %52 {strides = array<i32>} : memref<4x960xf32, #tpu.memory_space<vmem>>, vector<4x960xf32>,
    return
  }
}

</mosaic_0001>

<llo_original>
// kernel: forward.1
$region0: #{forward.1}
  #allocation0 [shape = 'u32[]', space=smem, size = 0x4, offset = 0x4, fixed_abs, tag = 'smem constant byte address 0x4 - core index']
  #allocation1 [shape = 'u32[144,128]{1,0:T(1,128)}', space=vmem, size = 0x12000, scoped, tag = 'internal scratch']
  %s0 = inlined_call_operand.vmem [shape: f32[4,12], index: 0, kind: input, shape index: {}]
  %s1 = inlined_call_operand.hbm [shape: f32[608,960], index: 1, kind: input, shape index: {}]
  %s2 = inlined_call_operand.vmem [shape: f32[4,960], index: 2, kind: output, shape index: {}]
  %s3 = sld [smem:[#allocation0]]
  $region22: #{forward.1} parent=0
    _
  %s5 = ssub.s32 1, %s3
  %s6 = scalar_select 0, %s5, %s3
  $region1: #{forward.1} parent=0
    #allocation2 [shape = 'u8[2490368]{0}', space=vmem, size = 0x260000, scoped, tag = 'input window, operand 1, single buffered']
    #allocation3 [shape = 's32[1]{0}', space=sflag, size = 0x4, scoped, tag = 'scoped memory for forward.1']
    %7 = vsyncpa [#allocation3], 0
    // Predicated region
    $region2: #{forward.1} parent=1 // pred_check
      _
    $region3: #{forward.1} parent=1 // pred_check_branch
      %9 = sbr.rel (0) target = $region5
    $region4: #{forward.1} parent=1 // pred_region
      _
    $region5: #{forward.1} parent=1 // pred_fallthru
      _
    // Predicated region
    $region6: #{forward.1} parent=1 // pred_check
      _
    $region7: #{forward.1} parent=1 // pred_check_branch
      %11 = sbr.rel (0) target = $region9
    $region8: #{forward.1} parent=1 // pred_region
      %s13 = ssub.s32 77824, 77824
      %14 = vsyncadd [#allocation3], %s13
      %s15 = sshll.u32 [#allocation2], 4
      %s16 = int_to_ptr.vmem [resolvable:$true] %s15
      %21 = dma.hbm_to_vmem [thread:$0]  %s1, 77824, %s16, [#allocation3], 1024, 1024, 64
    $region9: #{forward.1} parent=1 // pred_fallthru
      _
    // Predicated region
    $region10: #{forward.1} parent=1 // pred_check
      _
    $region11: #{forward.1} parent=1 // pred_check_branch
      %23 = sbr.rel (0) target = $region13
    $region12: #{forward.1} parent=1 // pred_region
      %24 = dma.done [#allocation3], 77824
    $region13: #{forward.1} parent=1 // pred_fallthru
      _
    %v25 = vld [vmem:[%s0] sm:$0xf]
    %v26 = vld [vmem:[#allocation2] sm:$0xff]
    %v27 = vld [vmem:[#allocation2 + $0x40] sm:$0xf]
    %v28 = vld [vmem:[#allocation2 + $0x80] ss:$0 sm:$0xff]
    %vm29 = vcmask 97280
    %v31 = vsel %vm29, %v25, 0
    %vm33 = vcmask 1043456
    %v35 = vsel %vm33, %v27, 0
    %37 = vmatprep.subr.mxu0 0.0
    %38 = vmatpush1.msra.mxu0 %v26
    %39 = vmatprep.subr.mxu0 0.0
    %40 = vmatpush1.msra.mxu0 %v35
    %41 = vmatprep.subr.mxu0 0.0
    %42 = vmatpush1.msra.mxu0 0.0
    %43 = vmatprep.subr.mxu0 0.0
    %44 = vmatpush1.msra.mxu0 0.0
    %45 = vmatprep.subr.mxu0 0.0
    %46 = vmatpush1.msra.mxu0 0.0
    %47 = vmatprep.subr.mxu0 0.0
    %48 = vmatpush1.msra.mxu0 0.0
    %49 = vmatprep.subr.mxu0 0.0
    %50 = vmatpush1.msra.mxu0 0.0
    %51 = vmatprep.subr.mxu0 0.0
    %52 = vmatpush1.msra.mxu0 0.0
    %53 = vmatprep.subr.mxu0 0.0
    %54 = vmatpush1.msra.mxu0 0.0
    %55 = vmatprep.subr.mxu0 0.0
    %56 = vmatpush1.msra.mxu0 0.0
    %57 = vmatprep.subr.mxu0 0.0
    %58 = vmatpush1.msra.mxu0 0.0
    %59 = vmatprep.subr.mxu0 0.0
    %60 = vmatpush1.msra.mxu0 0.0
    %61 = vmatprep.subr.mxu0 0.0
    %62 = vmatpush1.msra.mxu0 0.0
    %63 = vmatprep.subr.mxu0 0.0
    %64 = vmatpush1.msra.mxu0 0.0
    %65 = vmatprep.subr.mxu0 0.0
    %66 = vmatpush1.msra.mxu0 0.0
    %67 = vmatprep.subr.mxu0 0.0
    %68 = vmatpush1.msra.mxu0 0.0
    %69 = vmatprep.subr.mxu0 0.0
    %70 = vmatpush1.msra.mxu0 0.0
    %71 = vmatprep.subr.mxu0 0.0
    %72 = vmatpush1.msra.mxu0 0.0
    %73 = vmatprep.subr.mxu0 0.0
    %74 = vmatpush1.msra.mxu0 0.0
    %75 = vmatprep.subr.mxu0 0.0
    %76 = vmatpush1.msra.mxu0 0.0
    %77 = vmatprep.subr.mxu0 0.0
    %78 = vmatpush1.msra.mxu0 0.0
    %79 = vmatprep.subr.mxu0 0.0
    %80 = vmatpush1.msra.mxu0 0.0
    %81 = vmatprep.subr.mxu0 0.0
    %82 = vmatpush1.msra.mxu0 0.0
    %83 = vmatprep.subr.mxu0 0.0
    %84 = vmatpush1.msra.mxu0 0.0
    %85 = vmatprep.subr.mxu0 0.0
    %86 = vmatpush1.msra.mxu0 0.0
    %87 = vmatprep.subr.mxu0 0.0
    %88 = vmatpush1.msra.mxu0 0.0
    %89 = vmatprep.subr.mxu0 0.0
    %90 = vmatpush1.msra.mxu0 0.0
    %91 = vmatprep.subr.mxu0 0.0
    %92 = vmatpush1.msra.mxu0 0.0
    %93 = vmatprep.subr.mxu0 0.0
    %94 = vmatpush1.msra.mxu0 0.0
    %95 = vmatprep.subr.mxu0 0.0
    %96 = vmatpush1.msra.mxu0 0.0
    %97 = vmatprep.subr.mxu0 0.0
    %98 = vmatpush1.msra.mxu0 0.0
    %99 = vmatprep.subr.mxu0 0.0
    %100 = vmatpush1.msra.mxu0 0.0
    %101 = vmatprep.mubr.f32.mxu0 0.0
    %102 = vmatmul.mubr.f32.gmra.mrb[0].mxu0 %v31
    %v103 = vpop.f32.mrb[0].mxu0
    %v104 = vadd.f32 %v28, %v103
    %v105 = vpop.f32.mrb[0].mxu0
    %106 = vdwg.mxu0
    %v107 = vmul.f32 %v104, 0.5
    %v108 = vtanh.pop %v107
    %v109 = vmul.f32 %v108, 0.5
    %v110 = vadd.f32 %v109, 0.5
    %v111 = vmul.f32 %v104, %v110
    %v112 = vld [vmem:[#allocation2 + $0xc0] sm:$0xff]
    %v113 = vld [vmem:[#allocation2 + $0x100] sm:$0xff]
    %v114 = vld [vmem:[#allocation2 + $0x140] ss:$0 sm:$0xff]
    %vm115 = vcmask 130048
    %v117 = vsel %vm115, %v111, 0
    %119 = vmatprep.subr.mxu0 0.0
    %120 = vmatpush1.msra.mxu0 %v112
    %121 = vmatprep.subr.mxu0 0.0
    %122 = vmatpush1.msra.mxu0 %v113
    %123 = vmatprep.subr.mxu0 0.0
    %124 = vmatpush1.msra.mxu0 0.0
    %125 = vmatprep.subr.mxu0 0.0
    %126 = vmatpush1.msra.mxu0 0.0
    %127 = vmatprep.subr.mxu0 0.0
    %128 = vmatpush1.msra.mxu0 0.0
    %129 = vmatprep.subr.mxu0 0.0
    %130 = vmatpush1.msra.mxu0 0.0
    %131 = vmatprep.subr.mxu0 0.0
    %132 = vmatpush1.msra.mxu0 0.0
    %133 = vmatprep.subr.mxu0 0.0
    %134 = vmatpush1.msra.mxu0 0.0
    %135 = vmatprep.subr.mxu0 0.0
    %136 = vmatpush1.msra.mxu0 0.0
    %137 = vmatprep.subr.mxu0 0.0
    %138 = vmatpush1.msra.mxu0 0.0
    %139 = vmatprep.subr.mxu0 0.0
    %140 = vmatpush1.msra.mxu0 0.0
    %141 = vmatprep.subr.mxu0 0.0
    %142 = vmatpush1.msra.mxu0 0.0
    %143 = vmatprep.subr.mxu0 0.0
    %144 = vmatpush1.msra.mxu0 0.0
    %145 = vmatprep.subr.mxu0 0.0
    %146 = vmatpush1.msra.mxu0 0.0
    %147 = vmatprep.subr.mxu0 0.0
    %148 = vmatpush1.msra.mxu0 0.0
    %149 = vmatprep.subr.mxu0 0.0
    %150 = vmatpush1.msra.mxu0 0.0
    %151 = vmatprep.subr.mxu0 0.0
    %152 = vmatpush1.msra.mxu0 0.0
    %153 = vmatprep.subr.mxu0 0.0
    %154 = vmatpush1.msra.mxu0 0.0
    %155 = vmatprep.subr.mxu0 0.0
    %156 = vmatpush1.msra.mxu0 0.0
    %157 = vmatprep.subr.mxu0 0.0
    %158 = vmatpush1.msra.mxu0 0.0
    %159 = vmatprep.subr.mxu0 0.0
    %160 = vmatpush1.msra.mxu0 0.0
    %161 = vmatprep.subr.mxu0 0.0
    %162 = vmatpush1.msra.mxu0 0.0
    %163 = vmatprep.subr.mxu0 0.0
    %164 = vmatpush1.msra.mxu0 0.0
    %165 = vmatprep.subr.mxu0 0.0
    %166 = vmatpush1.msra.mxu0 0.0
    %167 = vmatprep.subr.mxu0 0.0
    %168 = vmatpush1.msra.mxu0 0.0
    %169 = vmatprep.subr.mxu0 0.0
    %170 = vmatpush1.msra.mxu0 0.0
    %171 = vmatprep.subr.mxu0 0.0
    %172 = vmatpush1.msra.mxu0 0.0
    %173 = vmatprep.subr.mxu0 0.0
    %174 = vmatpush1.msra.mxu0 0.0
    %175 = vmatprep.subr.mxu0 0.0
    %176 = vmatpush1.msra.mxu0 0.0
    %177 = vmatprep.subr.mxu0 0.0
    %178 = vmatpush1.msra.mxu0 0.0
    %179 = vmatprep.subr.mxu0 0.0
    %180 = vmatpush1.msra.mxu0 0.0
    %181 = vmatprep.subr.mxu0 0.0
    %182 = vmatpush1.msra.mxu0 0.0
    %183 = vmatprep.mubr.f32.mxu0 0.0
    %184 = vmatmul.mubr.f32.gmra.mrb[0].mxu0 %v117
    %v185 = vpop.f32.mrb[0].mxu0
    %v186 = vadd.f32 %v114, %v185
    %v187 = vpop.f32.mrb[0].mxu0
    %188 = vdwg.mxu0
    %v189 = vld [vmem:[#allocation2 + $0x180] sm:$0xff]
    %v190 = vld [vmem:[#allocation2 + $0x188] sm:$0xff]
    %v191 = vld [vmem:[#allocation2 + $0x1c0] sm:$0xf]
    %v192 = vld [vmem:[#allocation2 + $0x1c8] sm:$0xf]
    %v193 = vld [vmem:[#allocation2 + $0x200] sm:$0xff]
    %v194 = vld [vmem:[#allocation2 + $0x208] sm:$0xff]
    %v195 = vld [vmem:[#allocation2 + $0x240] sm:$0xff]
    %v196 = vld [vmem:[#allocation2 + $0x248] sm:$0xff]
    %v197 = vld [vmem:[#allocation2 + $0x280] sm:$0xff]
    %v198 = vld [vmem:[#allocation2 + $0x288] sm:$0xff]
    %v199 = vld [vmem:[#allocation2 + $0x2c0] sm:$0xff]
    %v200 = vld [vmem:[#allocation2 + $0x2c8] sm:$0xff]
    %v201 = vld [vmem:[#allocation2 + $0x300] sm:$0xff]
    %v202 = vld [vmem:[#allocation2 + $0x308] sm:$0xff]
    %vm203 = vcmask 326656
    %v205 = vsel %vm203, %v186, 0
    %207 = vmatprep.subr.mxu0 %v194
    %208 = vmatpush1.msra.mxu0 %v193
    %209 = vmatprep.subr.mxu0 %v196
    %210 = vmatpush1.msra.mxu0 %v195
    %211 = vmatprep.subr.mxu0 %v198
    %212 = vmatpush1.msra.mxu0 %v197
    %213 = vmatprep.subr.mxu0 %v200
    %214 = vmatpush1.msra.mxu0 %v199
    %215 = vmatprep.subr.mxu0 %v202
    %216 = vmatpush1.msra.mxu0 %v201
    %217 = vmatprep.subr.mxu0 0.0
    %218 = vmatpush1.msra.mxu0 0.0
    %219 = vmatprep.subr.mxu0 0.0
    %220 = vmatpush1.msra.mxu0 0.0
    %221 = vmatprep.subr.mxu0 0.0
    %222 = vmatpush1.msra.mxu0 0.0
    %223 = vmatprep.subr.mxu0 0.0
    %224 = vmatpush1.msra.mxu0 0.0
    %225 = vmatprep.subr.mxu0 0.0
    %226 = vmatpush1.msra.mxu0 0.0
    %227 = vmatprep.subr.mxu0 0.0
    %228 = vmatpush1.msra.mxu0 0.0
    %229 = vmatprep.subr.mxu0 0.0
    %230 = vmatpush1.msra.mxu0 0.0
    %231 = vmatprep.subr.mxu0 0.0
    %232 = vmatpush1.msra.mxu0 0.0
    %233 = vmatprep.subr.mxu0 0.0
    %234 = vmatpush1.msra.mxu0 0.0
    %235 = vmatprep.subr.mxu0 0.0
    %236 = vmatpush1.msra.mxu0 0.0
    %237 = vmatprep.subr.mxu0 0.0
    %238 = vmatpush1.msra.mxu0 0.0
    %239 = vmatprep.subr.mxu0 0.0
    %240 = vmatpush1.msra.mxu0 0.0
    %241 = vmatprep.subr.mxu0 0.0
    %242 = vmatpush1.msra.mxu0 0.0
    %243 = vmatprep.subr.mxu0 0.0
    %244 = vmatpush1.msra.mxu0 0.0
    %245 = vmatprep.subr.mxu0 0.0
    %246 = vmatpush1.msra.mxu0 0.0
    %247 = vmatprep.subr.mxu0 0.0
    %248 = vmatpush1.msra.mxu0 0.0
    %249 = vmatprep.subr.mxu0 0.0
    %250 = vmatpush1.msra.mxu0 0.0
    %251 = vmatprep.subr.mxu0 0.0
    %252 = vmatpush1.msra.mxu0 0.0
    %253 = vmatprep.subr.mxu0 0.0
    %254 = vmatpush1.msra.mxu0 0.0
    %255 = vmatprep.subr.mxu0 0.0
    %256 = vmatpush1.msra.mxu0 0.0
    %257 = vmatprep.subr.mxu0 0.0
    %258 = vmatpush1.msra.mxu0 0.0
    %259 = vmatprep.subr.mxu0 0.0
    %260 = vmatpush1.msra.mxu0 0.0
    %261 = vmatprep.subr.mxu0 0.0
    %262 = vmatpush1.msra.mxu0 0.0
    %263 = vmatprep.subr.mxu0 0.0
    %264 = vmatpush1.msra.mxu0 0.0
    %265 = vmatprep.subr.mxu0 0.0
    %266 = vmatpush1.msra.mxu0 0.0
    %267 = vmatprep.subr.mxu0 0.0
    %268 = vmatpush1.msra.mxu0 0.0
    %269 = vmatprep.subr.mxu0 0.0
    %270 = vmatpush1.msra.mxu0 0.0
    %271 = vmatprep.mubr.f32.mxu0 0.0
    %272 = vmatmul.mubr.f32.gmra.mrb[0].mxu0 %v205
    %v273 = vpop.f32.mrb[0].mxu0
    %v274 = vadd.f32 0.0, %v273
    %v275 = vpop.f32.mrb[0].mxu0
    %v276 = vadd.f32 0.0, %v275
    %277 = vdwg.mxu0
    %v279 = vsel %vm33, %v191, 0
    %v282 = vsel %vm33, %v192, 0
    %284 = vmatprep.subr.mxu0 %v190
    %285 = vmatpush1.msra.mxu0 %v189
    %286 = vmatprep.subr.mxu0 %v282
    %287 = vmatpush1.msra.mxu0 %v279
    %288 = vmatprep.subr.mxu0 0.0
    %289 = vmatpush1.msra.mxu0 0.0
    %290 = vmatprep.subr.mxu0 0.0
    %291 = vmatpush1.msra.mxu0 0.0
    %292 = vmatprep.subr.mxu0 0.0
    %293 = vmatpush1.msra.mxu0 0.0
    %294 = vmatprep.subr.mxu0 0.0
    %295 = vmatpush1.msra.mxu0 0.0
    %296 = vmatprep.subr.mxu0 0.0
    %297 = vmatpush1.msra.mxu0 0.0
    %298 = vmatprep.subr.mxu0 0.0
    %299 = vmatpush1.msra.mxu0 0.0
    %300 = vmatprep.subr.mxu0 0.0
    %301 = vmatpush1.msra.mxu0 0.0
    %302 = vmatprep.subr.mxu0 0.0
    %303 = vmatpush1.msra.mxu0 0.0
    %304 = vmatprep.subr.mxu0 0.0
    %305 = vmatpush1.msra.mxu0 0.0
    %306 = vmatprep.subr.mxu0 0.0
    %307 = vmatpush1.msra.mxu0 0.0
    %308 = vmatprep.subr.mxu0 0.0
    %309 = vmatpush1.msra.mxu0 0.0
    %310 = vmatprep.subr.mxu0 0.0
    %311 = vmatpush1.msra.mxu0 0.0
    %312 = vmatprep.subr.mxu0 0.0
    %313 = vmatpush1.msra.mxu0 0.0
    %314 = vmatprep.subr.mxu0 0.0
    %315 = vmatpush1.msra.mxu0 0.0
    %316 = vmatprep.subr.mxu0 0.0
    %317 = vmatpush1.msra.mxu0 0.0
    %318 = vmatprep.subr.mxu0 0.0
    %319 = vmatpush1.msra.mxu0 0.0
    %320 = vmatprep.subr.mxu0 0.0
    %321 = vmatpush1.msra.mxu0 0.0
    %322 = vmatprep.subr.mxu0 0.0
    %323 = vmatpush1.msra.mxu0 0.0
    %324 = vmatprep.subr.mxu0 0.0
    %325 = vmatpush1.msra.mxu0 0.0
    %326 = vmatprep.subr.mxu0 0.0
    %327 = vmatpush1.msra.mxu0 0.0
    %328 = vmatprep.subr.mxu0 0.0
    %329 = vmatpush1.msra.mxu0 0.0
    %330 = vmatprep.subr.mxu0 0.0
    %331 = vmatpush1.msra.mxu0 0.0
    %332 = vmatprep.subr.mxu0 0.0
    %333 = vmatpush1.msra.mxu0 0.0
    %334 = vmatprep.subr.mxu0 0.0
    %335 = vmatpush1.msra.mxu0 0.0
    %336 = vmatprep.subr.mxu0 0.0
    %337 = vmatpush1.msra.mxu0 0.0
    %338 = vmatprep.subr.mxu0 0.0
    %339 = vmatpush1.msra.mxu0 0.0
    %340 = vmatprep.subr.mxu0 0.0
    %341 = vmatpush1.msra.mxu0 0.0
    %342 = vmatprep.subr.mxu0 0.0
    %343 = vmatpush1.msra.mxu0 0.0
    %344 = vmatprep.subr.mxu0 0.0
    %345 = vmatpush1.msra.mxu0 0.0
    %346 = vmatprep.subr.mxu0 0.0
    %347 = vmatpush1.msra.mxu0 0.0
    %348 = vmatprep.mubr.f32.mxu0 0.0
    %349 = vmatmul.mubr.f32.gmra.mrb[0].mxu0 %v31
    %v350 = vpop.f32.mrb[0].mxu0
    %v351 = vadd.f32 %v274, %v350
    %v352 = vpop.f32.mrb[0].mxu0
    %v353 = vadd.f32 %v276, %v352
    %354 = vdwg.mxu0
    %s355 = scalar_lea.vmem [#allocation2], 832
    %v356 = vld [vmem:[%s355] ss:$8 sm:$0x3]
    %v358 = vlaneseq
    %v359 = vshrl.u32 %v358, 7
    %v360 = vsub.s32 0, %v359
    %v361 = vrot.slane %v356, %v360
    %v362 = vlaneseq
    %v363 = vshrl.u32 %v362, 7
    %v364 = vsub.s32 1, %v363
    %v365 = vrot.slane %v356, %v364
    %v368 = vadd.f32 %v351, %v361
    %v369 = vadd.f32 %v353, %v365
    %v370 = vmul.f32 %v368, 0.5
    %v371 = vmul.f32 %v369, 0.5
    %v372 = vtanh.pop %v370
    %v373 = vtanh.pop %v371
    %v374 = vmul.f32 %v372, 0.5
    %v375 = vmul.f32 %v373, 0.5
    %v376 = vadd.f32 %v374, 0.5
    %v377 = vadd.f32 %v375, 0.5
    %v378 = vmul.f32 %v368, %v376
    %v379 = vmul.f32 %v369, %v377
    %v380 = vld [vmem:[#allocation2 + $0x380] sm:$0xff]
    %v381 = vld [vmem:[#allocation2 + $0x388] sm:$0xff]
    %v382 = vld [vmem:[#allocation2 + $0x390] sm:$0xff]
    %v383 = vld [vmem:[#allocation2 + $0x3c0] sm:$0xff]
    %v384 = vld [vmem:[#allocation2 + $0x3c8] sm:$0xff]
    %v385 = vld [vmem:[#allocation2 + $0x3d0] sm:$0xff]
    %v386 = vld [vmem:[#allocation2 + $0x400] sm:$0xff]
    %v387 = vld [vmem:[#allocation2 + $0x408] sm:$0xff]
    %v388 = vld [vmem:[#allocation2 + $0x410] sm:$0xff]
    %v389 = vld [vmem:[#allocation2 + $0x440] sm:$0xff]
    %v390 = vld [vmem:[#allocation2 + $0x448] sm:$0xff]
    %v391 = vld [vmem:[#allocation2 + $0x450] sm:$0xff]
    %v392 = vld [vmem:[#allocation2 + $0x480] sm:$0xff]
    %v393 = vld [vmem:[#allocation2 + $0x488] sm:$0xff]
    %v394 = vld [vmem:[#allocation2 + $0x490] sm:$0xff]
    %v395 = vld [vmem:[#allocation2 + $0x4c0] sm:$0xff]
    %v396 = vld [vmem:[#allocation2 + $0x4c8] sm:$0xff]
    %v397 = vld [vmem:[#allocation2 + $0x4d0] sm:$0xff]
    %v398 = vld [vmem:[#allocation2 + $0x500] sm:$0xff]
    %v399 = vld [vmem:[#allocation2 + $0x508] sm:$0xff]
    %v400 = vld [vmem:[#allocation2 + $0x510] sm:$0xff]
    %v401 = vld [vmem:[#allocation2 + $0x540] sm:$0xff]
    %v402 = vld [vmem:[#allocation2 + $0x548] sm:$0xff]
    %v403 = vld [vmem:[#allocation2 + $0x550] sm:$0xff]
    %v404 = vld [vmem:[#allocation2 + $0x580] sm:$0xff]
    %v405 = vld [vmem:[#allocation2 + $0x588] sm:$0xff]
    %v406 = vld [vmem:[#allocation2 + $0x590] sm:$0xff]
    %v407 = vld [vmem:[#allocation2 + $0x5c0] sm:$0xff]
    %v408 = vld [vmem:[#allocation2 + $0x5c8] sm:$0xff]
    %v409 = vld [vmem:[#allocation2 + $0x5d0] sm:$0xff]
    %v410 = vld [vmem:[#allocation2 + $0x600] sm:$0xff]
    %v411 = vld [vmem:[#allocation2 + $0x608] sm:$0xff]
    %v412 = vld [vmem:[#allocation2 + $0x610] sm:$0xff]
    %v413 = vld [vmem:[#allocation2 + $0x640] sm:$0xff]
    %v414 = vld [vmem:[#allocation2 + $0x648] sm:$0xff]
    %v415 = vld [vmem:[#allocation2 + $0x650] sm:$0xff]
    %v416 = vld [vmem:[#allocation2 + $0x680] sm:$0xff]
    %v417 = vld [vmem:[#allocation2 + $0x688] sm:$0xff]
    %v418 = vld [vmem:[#allocation2 + $0x690] sm:$0xff]
    %v419 = vld [vmem:[#allocation2 + $0x6c0] sm:$0xff]
    %v420 = vld [vmem:[#allocation2 + $0x6c8] sm:$0xff]
    %v421 = vld [vmem:[#allocation2 + $0x6d0] sm:$0xff]
    %v422 = vld [vmem:[#allocation2 + $0x700] sm:$0xff]
    %v423 = vld [vmem:[#allocation2 + $0x708] sm:$0xff]
    %v424 = vld [vmem:[#allocation2 + $0x710] sm:$0xff]
    %v425 = vld [vmem:[#allocation2 + $0x740] sm:$0xff]
    %v426 = vld [vmem:[#allocation2 + $0x748] sm:$0xff]
    %v427 = vld [vmem:[#allocation2 + $0x750] sm:$0xff]
    %v428 = vld [vmem:[#allocation2 + $0x780] sm:$0xff]
    %v429 = vld [vmem:[#allocation2 + $0x788] sm:$0xff]
    %v430 = vld [vmem:[#allocation2 + $0x790] sm:$0xff]
    %v431 = vld [vmem:[#allocation2 + $0x7c0] sm:$0xff]
    %v432 = vld [vmem:[#allocation2 + $0x7c8] sm:$0xff]
    %v433 = vld [vmem:[#allocation2 + $0x7d0] sm:$0xff]
    %v434 = vld [vmem:[#allocation2 + $0x800] sm:$0xff]
    %v435 = vld [vmem:[#allocation2 + $0x808] sm:$0xff]
    %v436 = vld [vmem:[#allocation2 + $0x810] sm:$0xff]
    %v437 = vld [vmem:[#allocation2 + $0x840] sm:$0xff]
    %v438 = vld [vmem:[#allocation2 + $0x848] sm:$0xff]
    %v439 = vld [vmem:[#allocation2 + $0x850] sm:$0xff]
    %s440 = scalar_lea.vmem [#allocation2], 2176
    %v441 = vld [vmem:[%s440] ss:$8 sm:$0x7]
    %v443 = vlaneseq
    %v444 = vshrl.u32 %v443, 7
    %v445 = vsub.s32 0, %v444
    %v446 = vrot.slane %v441, %v445
    %v447 = vlaneseq
    %v448 = vshrl.u32 %v447, 7
    %v449 = vsub.s32 1, %v448
    %v450 = vrot.slane %v441, %v449
    %v451 = vlaneseq
    %v452 = vshrl.u32 %v451, 7
    %v453 = vsub.s32 2, %v452
    %v454 = vrot.slane %v441, %v453
    %vm458 = vcmask 261120
    %v460 = vsel %vm458, %v379, 0
    %462 = vmatprep.subr.mxu0 %v381
    %463 = vmatpush1.msra.mxu0 %v380
    %464 = vmatprep.subr.mxu0 %v384
    %465 = vmatpush1.msra.mxu0 %v383
    %466 = vmatprep.subr.mxu0 %v387
    %467 = vmatpush1.msra.mxu0 %v386
    %468 = vmatprep.subr.mxu0 %v390
    %469 = vmatpush1.msra.mxu0 %v389
    %470 = vmatprep.subr.mxu0 %v393
    %471 = vmatpush1.msra.mxu0 %v392
    %472 = vmatprep.subr.mxu0 %v396
    %473 = vmatpush1.msra.mxu0 %v395
    %474 = vmatprep.subr.mxu0 %v399
    %475 = vmatpush1.msra.mxu0 %v398
    %476 = vmatprep.subr.mxu0 %v402
    %477 = vmatpush1.msra.mxu0 %v401
    %478 = vmatprep.subr.mxu0 %v405
    %479 = vmatpush1.msra.mxu0 %v404
    %480 = vmatprep.subr.mxu0 %v408
    %481 = vmatpush1.msra.mxu0 %v407
    %482 = vmatprep.subr.mxu0 %v411
    %483 = vmatpush1.msra.mxu0 %v410
    %484 = vmatprep.subr.mxu0 %v414
    %485 = vmatpush1.msra.mxu0 %v413
    %486 = vmatprep.subr.mxu0 %v417
    %487 = vmatpush1.msra.mxu0 %v416
    %488 = vmatprep.subr.mxu0 %v420
    %489 = vmatpush1.msra.mxu0 %v419
    %490 = vmatprep.subr.mxu0 %v423
    %491 = vmatpush1.msra.mxu0 %v422
    %492 = vmatprep.subr.mxu0 %v426
    %493 = vmatpush1.msra.mxu0 %v425
    %494 = vmatprep.subr.mxu0 %v429
    %495 = vmatpush1.msra.mxu0 %v428
    %496 = vmatprep.subr.mxu0 %v432
    %497 = vmatpush1.msra.mxu0 %v431
    %498 = vmatprep.subr.mxu0 %v435
    %499 = vmatpush1.msra.mxu0 %v434
    %500 = vmatprep.subr.mxu0 %v438
    %501 = vmatpush1.msra.mxu0 %v437
    %502 = vmatprep.subr.mxu0 0.0
    %503 = vmatpush1.msra.mxu0 0.0
    %504 = vmatprep.subr.mxu0 0.0
    %505 = vmatpush1.msra.mxu0 0.0
    %506 = vmatprep.subr.mxu0 0.0
    %507 = vmatpush1.msra.mxu0 0.0
    %508 = vmatprep.subr.mxu0 0.0
    %509 = vmatpush1.msra.mxu0 0.0
    %510 = vmatprep.subr.mxu0 0.0
    %511 = vmatpush1.msra.mxu0 0.0
    %512 = vmatprep.subr.mxu0 0.0
    %513 = vmatpush1.msra.mxu0 0.0
    %514 = vmatprep.subr.mxu0 0.0
    %515 = vmatpush1.msra.mxu0 0.0
    %516 = vmatprep.subr.mxu0 0.0
    %517 = vmatpush1.msra.mxu0 0.0
    %518 = vmatprep.subr.mxu0 0.0
    %519 = vmatpush1.msra.mxu0 0.0
    %520 = vmatprep.subr.mxu0 0.0
    %521 = vmatpush1.msra.mxu0 0.0
    %522 = vmatprep.subr.mxu0 0.0
    %523 = vmatpush1.msra.mxu0 0.0
    %524 = vmatprep.subr.mxu0 0.0
    %525 = vmatpush1.msra.mxu0 0.0
    %526 = vmatprep.mubr.f32.mxu0 %v460
    %527 = vmatmul.mubr.f32.gmra.mrb[0].mxu0 %v378
    %v528 = vpop.f32.mrb[0].mxu0
    %v529 = vadd.f32 %v446, %v528
    %v530 = vpop.f32.mrb[0].mxu0
    %v531 = vadd.f32 %v450, %v530
    %532 = vdwg.mxu0
    %533 = vmatprep.subr.mxu0 0.0
    %534 = vmatpush1.msra.mxu0 %v382
    %535 = vmatprep.subr.mxu0 0.0
    %536 = vmatpush1.msra.mxu0 %v385
    %537 = vmatprep.subr.mxu0 0.0
    %538 = vmatpush1.msra.mxu0 %v388
    %539 = vmatprep.subr.mxu0 0.0
    %540 = vmatpush1.msra.mxu0 %v391
    %541 = vmatprep.subr.mxu0 0.0
    %542 = vmatpush1.msra.mxu0 %v394
    %543 = vmatprep.subr.mxu0 0.0
    %544 = vmatpush1.msra.mxu0 %v397
    %545 = vmatprep.subr.mxu0 0.0
    %546 = vmatpush1.msra.mxu0 %v400
    %547 = vmatprep.subr.mxu0 0.0
    %548 = vmatpush1.msra.mxu0 %v403
    %549 = vmatprep.subr.mxu0 0.0
    %550 = vmatpush1.msra.mxu0 %v406
    %551 = vmatprep.subr.mxu0 0.0
    %552 = vmatpush1.msra.mxu0 %v409
    %553 = vmatprep.subr.mxu0 0.0
    %554 = vmatpush1.msra.mxu0 %v412
    %555 = vmatprep.subr.mxu0 0.0
    %556 = vmatpush1.msra.mxu0 %v415
    %557 = vmatprep.subr.mxu0 0.0
    %558 = vmatpush1.msra.mxu0 %v418
    %559 = vmatprep.subr.mxu0 0.0
    %560 = vmatpush1.msra.mxu0 %v421
    %561 = vmatprep.subr.mxu0 0.0
    %562 = vmatpush1.msra.mxu0 %v424
    %563 = vmatprep.subr.mxu0 0.0
    %564 = vmatpush1.msra.mxu0 %v427
    %565 = vmatprep.subr.mxu0 0.0
    %566 = vmatpush1.msra.mxu0 %v430
    %567 = vmatprep.subr.mxu0 0.0
    %568 = vmatpush1.msra.mxu0 %v433
    %569 = vmatprep.subr.mxu0 0.0
    %570 = vmatpush1.msra.mxu0 %v436
    %571 = vmatprep.subr.mxu0 0.0
    %572 = vmatpush1.msra.mxu0 %v439
    %573 = vmatprep.subr.mxu0 0.0
    %574 = vmatpush1.msra.mxu0 0.0
    %575 = vmatprep.subr.mxu0 0.0
    %576 = vmatpush1.msra.mxu0 0.0
    %577 = vmatprep.subr.mxu0 0.0
    %578 = vmatpush1.msra.mxu0 0.0
    %579 = vmatprep.subr.mxu0 0.0
    %580 = vmatpush1.msra.mxu0 0.0
    %581 = vmatprep.subr.mxu0 0.0
    %582 = vmatpush1.msra.mxu0 0.0
    %583 = vmatprep.subr.mxu0 0.0
    %584 = vmatpush1.msra.mxu0 0.0
    %585 = vmatprep.subr.mxu0 0.0
    %586 = vmatpush1.msra.mxu0 0.0
    %587 = vmatprep.subr.mxu0 0.0
    %588 = vmatpush1.msra.mxu0 0.0
    %589 = vmatprep.subr.mxu0 0.0
    %590 = vmatpush1.msra.mxu0 0.0
    %591 = vmatprep.subr.mxu0 0.0
    %592 = vmatpush1.msra.mxu0 0.0
    %593 = vmatprep.subr.mxu0 0.0
    %594 = vmatpush1.msra.mxu0 0.0
    %595 = vmatprep.subr.mxu0 0.0
    %596 = vmatpush1.msra.mxu0 0.0
    %597 = vmatprep.mubr.f32.mxu0 %v460
    %598 = vmatmul.mubr.f32.gmra.mrb[0].mxu0 %v378
    %v599 = vpop.f32.mrb[0].mxu0
    %v600 = vadd.f32 %v454, %v599
    %v601 = vpop.f32.mrb[0].mxu0
    %602 = vdwg.mxu0
    %v603 = vmul.f32 %v529, 0.5
    %v604 = vmul.f32 %v531, 0.5
    %v605 = vmul.f32 %v600, 0.5
    %v606 = vtanh.pop %v603
    %v607 = vtanh.pop %v604
    %v608 = vtanh.pop %v605
    %v609 = vmul.f32 %v606, 0.5
    %v610 = vmul.f32 %v607, 0.5
    %v611 = vmul.f32 %v608, 0.5
    %v612 = vadd.f32 %v609, 0.5
    %v613 = vadd.f32 %v610, 0.5
    %v614 = vadd.f32 %v611, 0.5
    %v615 = vmul.f32 %v529, %v612
    %v616 = vmul.f32 %v531, %v613
    %v617 = vmul.f32 %v600, %v614
    %v618 = vld [vmem:[#allocation2 + $0x8c0] sm:$0xff]
    %v619 = vld [vmem:[#allocation2 + $0x8c8] sm:$0xff]
    %v620 = vld [vmem:[#allocation2 + $0x8d0] sm:$0xff]
    %v621 = vld [vmem:[#allocation2 + $0x8d8] sm:$0xff]
    %v622 = vld [vmem:[#allocation2 + $0x8e0] sm:$0xff]
    %v623 = vld [vmem:[#allocation2 + $0x8e8] sm:$0xff]
    %v624 = vld [vmem:[#allocation2 + $0x8f0] sm:$0xff]
    %v625 = vld [vmem:[#allocation2 + $0x8f8] sm:$0xff]
    %v626 = vld [vmem:[#allocation2 + $0x900] sm:$0xff]
    %v627 = vld [vmem:[#allocation2 + $0x908] sm:$0xff]
    %v628 = vld [vmem:[#allocation2 + $0x910] sm:$0xff]
    %v629 = vld [vmem:[#allocation2 + $0x918] sm:$0xff]
    %v630 = vld [vmem:[#allocation2 + $0x920] sm:$0xff]
    %v631 = vld [vmem:[#allocation2 + $0x928] sm:$0xff]
    %v632 = vld [vmem:[#allocation2 + $0x930] sm:$0xff]
    %v633 = vld [vmem:[#allocation2 + $0x938] sm:$0xff]
    %v634 = vld [vmem:[#allocation2 + $0x940] sm:$0xff]
    %v635 = vld [vmem:[#allocation2 + $0x948] sm:$0xff]
    %v636 = vld [vmem:[#allocation2 + $0x950] sm:$0xff]
    %v637 = vld [vmem:[#allocation2 + $0x958] sm:$0xff]
    %v638 = vld [vmem:[#allocation2 + $0x960] sm:$0xff]
    %v639 = vld [vmem:[#allocation2 + $0x968] sm:$0xff]
    %v640 = vld [vmem:[#allocation2 + $0x970] sm:$0xff]
    %v641 = vld [vmem:[#allocation2 + $0x978] sm:$0xff]
    %v642 = vld [vmem:[#allocation2 + $0x980] sm:$0xff]
    %v643 = vld [vmem:[#allocation2 + $0x988] sm:$0xff]
    %v644 = vld [vmem:[#allocation2 + $0x990] sm:$0xff]
    %v645 = vld [vmem:[#allocation2 + $0x998] sm:$0xff]
    %v646 = vld [vmem:[#allocation2 + $0x9a0] sm:$0xff]
    %v647 = vld [vmem:[#allocation2 + $0x9a8] sm:$0xff]
    %v648 = vld [vmem:[#allocation2 + $0x9b0] sm:$0xff]
    %v649 = vld [vmem:[#allocation2 + $0x9b8] sm:$0xff]
    %v650 = vld [vmem:[#allocation2 + $0x9c0] sm:$0xff]
    %v651 = vld [vmem:[#allocation2 + $0x9c8] sm:$0xff]
    %v652 = vld [vmem:[#allocation2 + $0x9d0] sm:$0xff]
    %v653 = vld [vmem:[#allocation2 + $0x9d8] sm:$0xff]
    %v654 = vld [vmem:[#allocation2 + $0x9e0] sm:$0xff]
    %v655 = vld [vmem:[#allocation2 + $0x9e8] sm:$0xff]
    %v656 = vld [vmem:[#allocation2 + $0x9f0] sm:$0xff]
    %v657 = vld [vmem:[#allocation2 + $0x9f8] sm:$0xff]
    %v658 = vld [vmem:[#allocation2 + $0xa00] sm:$0xff]
    %v659 = vld [vmem:[#allocation2 + $0xa08] sm:$0xff]
    %v660 = vld [vmem:[#allocation2 + $0xa10] sm:$0xff]
    %v661 = vld [vmem:[#allocation2 + $0xa18] sm:$0xff]
    %v662 = vld [vmem:[#allocation2 + $0xa20] sm:$0xff]
    %v663 = vld [vmem:[#allocation2 + $0xa28] sm:$0xff]
    %v664 = vld [vmem:[#allocation2 + $0xa30] sm:$0xff]
    %v665 = vld [vmem:[#allocation2 + $0xa38] sm:$0xff]
    %v666 = vld [vmem:[#allocation2 + $0xa40] sm:$0xff]
    %v667 = vld [vmem:[#allocation2 + $0xa48] sm:$0xff]
    %v668 = vld [vmem:[#allocation2 + $0xa50] sm:$0xff]
    %v669 = vld [vmem:[#allocation2 + $0xa58] sm:$0xff]
    %v670 = vld [vmem:[#allocation2 + $0xa60] sm:$0xff]
    %v671 = vld [vmem:[#allocation2 + $0xa68] sm:$0xff]
    %v672 = vld [vmem:[#allocation2 + $0xa70] sm:$0xff]
    %v673 = vld [vmem:[#allocation2 + $0xa78] sm:$0xff]
    %v674 = vld [vmem:[#allocation2 + $0xa80] sm:$0xff]
    %v675 = vld [vmem:[#allocation2 + $0xa88] sm:$0xff]
    %v676 = vld [vmem:[#allocation2 + $0xa90] sm:$0xff]
    %v677 = vld [vmem:[#allocation2 + $0xa98] sm:$0xff]
    %v678 = vld [vmem:[#allocation2 + $0xaa0] sm:$0xff]
    %v679 = vld [vmem:[#allocation2 + $0xaa8] sm:$0xff]
    %v680 = vld [vmem:[#allocation2 + $0xab0] sm:$0xff]
    %v681 = vld [vmem:[#allocation2 + $0xab8] sm:$0xff]
    %v682 = vld [vmem:[#allocation2 + $0xac0] sm:$0xff]
    %v683 = vld [vmem:[#allocation2 + $0xac8] sm:$0xff]
    %v684 = vld [vmem:[#allocation2 + $0xad0] sm:$0xff]
    %v685 = vld [vmem:[#allocation2 + $0xad8] sm:$0xff]
    %v686 = vld [vmem:[#allocation2 + $0xae0] sm:$0xff]
    %v687 = vld [vmem:[#allocation2 + $0xae8] sm:$0xff]
    %v688 = vld [vmem:[#allocation2 + $0xaf0] sm:$0xff]
    %v689 = vld [vmem:[#allocation2 + $0xaf8] sm:$0xff]
    %v690 = vld [vmem:[#allocation2 + $0xb00] sm:$0xff]
    %v691 = vld [vmem:[#allocation2 + $0xb08] sm:$0xff]
    %v692 = vld [vmem:[#allocation2 + $0xb10] sm:$0xff]
    %v693 = vld [vmem:[#allocation2 + $0xb18] sm:$0xff]
    %v694 = vld [vmem:[#allocation2 + $0xb20] sm:$0xff]
    %v695 = vld [vmem:[#allocation2 + $0xb28] sm:$0xff]
    %v696 = vld [vmem:[#allocation2 + $0xb30] sm:$0xff]
    %v697 = vld [vmem:[#allocation2 + $0xb38] sm:$0xff]
    %v698 = vld [vmem:[#allocation2 + $0xb40] sm:$0xff]
    %v699 = vld [vmem:[#allocation2 + $0xb48] sm:$0xff]
    %v700 = vld [vmem:[#allocation2 + $0xb50] sm:$0xff]
    %v701 = vld [vmem:[#allocation2 + $0xb58] sm:$0xff]
    %v702 = vld [vmem:[#allocation2 + $0xb60] sm:$0xff]
    %v703 = vld [vmem:[#allocation2 + $0xb68] sm:$0xff]
    %v704 = vld [vmem:[#allocation2 + $0xb70] sm:$0xff]
    %v705 = vld [vmem:[#allocation2 + $0xb78] sm:$0xff]
    %v706 = vld [vmem:[#allocation2 + $0xb80] sm:$0xff]
    %v707 = vld [vmem:[#allocation2 + $0xb88] sm:$0xff]
    %v708 = vld [vmem:[#allocation2 + $0xb90] sm:$0xff]
    %v709 = vld [vmem:[#allocation2 + $0xb98] sm:$0xff]
    %v710 = vld [vmem:[#allocation2 + $0xba0] sm:$0xff]
    %v711 = vld [vmem:[#allocation2 + $0xba8] sm:$0xff]
    %v712 = vld [vmem:[#allocation2 + $0xbb0] sm:$0xff]
    %v713 = vld [vmem:[#allocation2 + $0xbb8] sm:$0xff]
    %v714 = vld [vmem:[#allocation2 + $0xbc0] sm:$0xff]
    %v715 = vld [vmem:[#allocation2 + $0xbc8] sm:$0xff]
    %v716 = vld [vmem:[#allocation2 + $0xbd0] sm:$0xff]
    %v717 = vld [vmem:[#allocation2 + $0xbd8] sm:$0xff]
    %v718 = vld [vmem:[#allocation2 + $0xbe0] sm:$0xff]
    %v719 = vld [vmem:[#allocation2 + $0xbe8] sm:$0xff]
    %v720 = vld [vmem:[#allocation2 + $0xbf0] sm:$0xff]
    %v721 = vld [vmem:[#allocation2 + $0xbf8] sm:$0xff]
    %v722 = vld [vmem:[#allocation2 + $0xc00] sm:$0xff]
    %v723 = vld [vmem:[#allocation2 + $0xc08] sm:$0xff]
    %v724 = vld [vmem:[#allocation2 + $0xc10] sm:$0xff]
    %v725 = vld [vmem:[#allocation2 + $0xc18] sm:$0xff]
    %v726 = vld [vmem:[#allocation2 + $0xc20] sm:$0xff]
    %v727 = vld [vmem:[#allocation2 + $0xc28] sm:$0xff]
    %v728 = vld [vmem:[#allocation2 + $0xc30] sm:$0xff]
    %v729 = vld [vmem:[#allocation2 + $0xc38] sm:$0xff]
    %v730 = vld [vmem:[#allocation2 + $0xc40] sm:$0xff]
    %v731 = vld [vmem:[#allocation2 + $0xc48] sm:$0xff]
    %v732 = vld [vmem:[#allocation2 + $0xc50] sm:$0xff]
    %v733 = vld [vmem:[#allocation2 + $0xc58] sm:$0xff]
    %v734 = vld [vmem:[#allocation2 + $0xc60] sm:$0xff]
    %v735 = vld [vmem:[#allocation2 + $0xc68] sm:$0xff]
    %v736 = vld [vmem:[#allocation2 + $0xc70] sm:$0xff]
    %v737 = vld [vmem:[#allocation2 + $0xc78] sm:$0xff]
    %v738 = vld [vmem:[#allocation2 + $0xc80] sm:$0xff]
    %v739 = vld [vmem:[#allocation2 + $0xc88] sm:$0xff]
    %v740 = vld [vmem:[#allocation2 + $0xc90] sm:$0xff]
    %v741 = vld [vmem:[#allocation2 + $0xc98] sm:$0xff]
    %v742 = vld [vmem:[#allocation2 + $0xca0] sm:$0xff]
    %v743 = vld [vmem:[#allocation2 + $0xca8] sm:$0xff]
    %v744 = vld [vmem:[#allocation2 + $0xcb0] sm:$0xff]
    %v745 = vld [vmem:[#allocation2 + $0xcb8] sm:$0xff]
    %v746 = vld [vmem:[#allocation2 + $0xcc0] sm:$0xff]
    %v747 = vld [vmem:[#allocation2 + $0xcc8] sm:$0xff]
    %v748 = vld [vmem:[#allocation2 + $0xcd0] sm:$0xff]
    %v749 = vld [vmem:[#allocation2 + $0xcd8] sm:$0xff]
    %v750 = vld [vmem:[#allocation2 + $0xce0] sm:$0xff]
    %v751 = vld [vmem:[#allocation2 + $0xce8] sm:$0xff]
    %v752 = vld [vmem:[#allocation2 + $0xcf0] sm:$0xff]
    %v753 = vld [vmem:[#allocation2 + $0xcf8] sm:$0xff]
    %v754 = vld [vmem:[#allocation2 + $0xd00] sm:$0xff]
    %v755 = vld [vmem:[#allocation2 + $0xd08] sm:$0xff]
    %v756 = vld [vmem:[#allocation2 + $0xd10] sm:$0xff]
    %v757 = vld [vmem:[#allocation2 + $0xd18] sm:$0xff]
    %v758 = vld [vmem:[#allocation2 + $0xd20] sm:$0xff]
    %v759 = vld [vmem:[#allocation2 + $0xd28] sm:$0xff]
    %v760 = vld [vmem:[#allocation2 + $0xd30] sm:$0xff]
    %v761 = vld [vmem:[#allocation2 + $0xd38] sm:$0xff]
    %v762 = vld [vmem:[#allocation2 + $0xd40] sm:$0xff]
    %v763 = vld [vmem:[#allocation2 + $0xd48] sm:$0xff]
    %v764 = vld [vmem:[#allocation2 + $0xd50] sm:$0xff]
    %v765 = vld [vmem:[#allocation2 + $0xd58] sm:$0xff]
    %v766 = vld [vmem:[#allocation2 + $0xd60] sm:$0xff]
    %v767 = vld [vmem:[#allocation2 + $0xd68] sm:$0xff]
    %v768 = vld [vmem:[#allocation2 + $0xd70] sm:$0xff]
    %v769 = vld [vmem:[#allocation2 + $0xd78] sm:$0xff]
    %v770 = vld [vmem:[#allocation2 + $0xd80] sm:$0xff]
    %v771 = vld [vmem:[#allocation2 + $0xd88] sm:$0xff]
    %v772 = vld [vmem:[#allocation2 + $0xd90] sm:$0xff]
    %v773 = vld [vmem:[#allocation2 + $0xd98] sm:$0xff]
    %v774 = vld [vmem:[#allocation2 + $0xda0] sm:$0xff]
    %v775 = vld [vmem:[#allocation2 + $0xda8] sm:$0xff]
    %v776 = vld [vmem:[#allocation2 + $0xdb0] sm:$0xff]
    %v777 = vld [vmem:[#allocation2 + $0xdb8] sm:$0xff]
    %v778 = vld [vmem:[#allocation2 + $0xdc0] sm:$0xff]
    %v779 = vld [vmem:[#allocation2 + $0xdc8] sm:$0xff]
    %v780 = vld [vmem:[#allocation2 + $0xdd0] sm:$0xff]
    %v781 = vld [vmem:[#allocation2 + $0xdd8] sm:$0xff]
    %v782 = vld [vmem:[#allocation2 + $0xde0] sm:$0xff]
    %v783 = vld [vmem:[#allocation2 + $0xde8] sm:$0xff]
    %v784 = vld [vmem:[#allocation2 + $0xdf0] sm:$0xff]
    %v785 = vld [vmem:[#allocation2 + $0xdf8] sm:$0xff]
    %v786 = vld [vmem:[#allocation2 + $0xe00] sm:$0xff]
    %v787 = vld [vmem:[#allocation2 + $0xe08] sm:$0xff]
    %v788 = vld [vmem:[#allocation2 + $0xe10] sm:$0xff]
    %v789 = vld [vmem:[#allocation2 + $0xe18] sm:$0xff]
    %v790 = vld [vmem:[#allocation2 + $0xe20] sm:$0xff]
    %v791 = vld [vmem:[#allocation2 + $0xe28] sm:$0xff]
    %v792 = vld [vmem:[#allocation2 + $0xe30] sm:$0xff]
    %v793 = vld [vmem:[#allocation2 + $0xe38] sm:$0xff]
    %v794 = vld [vmem:[#allocation2 + $0xe40] sm:$0xff]
    %v795 = vld [vmem:[#allocation2 + $0xe48] sm:$0xff]
    %v796 = vld [vmem:[#allocation2 + $0xe50] sm:$0xff]
    %v797 = vld [vmem:[#allocation2 + $0xe58] sm:$0xff]
    %v798 = vld [vmem:[#allocation2 + $0xe60] sm:$0xff]
    %v799 = vld [vmem:[#allocation2 + $0xe68] sm:$0xff]
    %v800 = vld [vmem:[#allocation2 + $0xe70] sm:$0xff]
    %v801 = vld [vmem:[#allocation2 + $0xe78] sm:$0xff]
    %v802 = vld [vmem:[#allocation2 + $0xe80] sm:$0xff]
    %v803 = vld [vmem:[#allocation2 + $0xe88] sm:$0xff]
    %v804 = vld [vmem:[#allocation2 + $0xe90] sm:$0xff]
    %v805 = vld [vmem:[#allocation2 + $0xe98] sm:$0xff]
    %v806 = vld [vmem:[#allocation2 + $0xea0] sm:$0xff]
    %v807 = vld [vmem:[#allocation2 + $0xea8] sm:$0xff]
    %v808 = vld [vmem:[#allocation2 + $0xeb0] sm:$0xff]
    %v809 = vld [vmem:[#allocation2 + $0xeb8] sm:$0xff]
    %v810 = vld [vmem:[#allocation2 + $0xec0] sm:$0xff]
    %v811 = vld [vmem:[#allocation2 + $0xec8] sm:$0xff]
    %v812 = vld [vmem:[#allocation2 + $0xed0] sm:$0xff]
    %v813 = vld [vmem:[#allocation2 + $0xed8] sm:$0xff]
    %v814 = vld [vmem:[#allocation2 + $0xee0] sm:$0xff]
    %v815 = vld [vmem:[#allocation2 + $0xee8] sm:$0xff]
    %v816 = vld [vmem:[#allocation2 + $0xef0] sm:$0xff]
    %v817 = vld [vmem:[#allocation2 + $0xef8] sm:$0xff]
    %v818 = vld [vmem:[#allocation2 + $0xf00] sm:$0xff]
    %v819 = vld [vmem:[#allocation2 + $0xf08] sm:$0xff]
    %v820 = vld [vmem:[#allocation2 + $0xf10] sm:$0xff]
    %v821 = vld [vmem:[#allocation2 + $0xf18] sm:$0xff]
    %v822 = vld [vmem:[#allocation2 + $0xf20] sm:$0xff]
    %v823 = vld [vmem:[#allocation2 + $0xf28] sm:$0xff]
    %v824 = vld [vmem:[#allocation2 + $0xf30] sm:$0xff]
    %v825 = vld [vmem:[#allocation2 + $0xf38] sm:$0xff]
    %v826 = vld [vmem:[#allocation2 + $0xf40] sm:$0xff]
    %v827 = vld [vmem:[#allocation2 + $0xf48] sm:$0xff]
    %v828 = vld [vmem:[#allocation2 + $0xf50] sm:$0xff]
    %v829 = vld [vmem:[#allocation2 + $0xf58] sm:$0xff]
    %v830 = vld [vmem:[#allocation2 + $0xf60] sm:$0xff]
    %v831 = vld [vmem:[#allocation2 + $0xf68] sm:$0xff]
    %v832 = vld [vmem:[#allocation2 + $0xf70] sm:$0xff]
    %v833 = vld [vmem:[#allocation2 + $0xf78] sm:$0xff]
    %v834 = vld [vmem:[#allocation2 + $0xf80] sm:$0xff]
    %v835 = vld [vmem:[#allocation2 + $0xf88] sm:$0xff]
    %v836 = vld [vmem:[#allocation2 + $0xf90] sm:$0xff]
    %v837 = vld [vmem:[#allocation2 + $0xf98] sm:$0xff]
    %v838 = vld [vmem:[#allocation2 + $0xfa0] sm:$0xff]
    %v839 = vld [vmem:[#allocation2 + $0xfa8] sm:$0xff]
    %v840 = vld [vmem:[#allocation2 + $0xfb0] sm:$0xff]
    %v841 = vld [vmem:[#allocation2 + $0xfb8] sm:$0xff]
    %v842 = vld [vmem:[#allocation2 + $0xfc0] sm:$0xff]
    %v843 = vld [vmem:[#allocation2 + $0xfc8] sm:$0xff]
    %v844 = vld [vmem:[#allocation2 + $0xfd0] sm:$0xff]
    %v845 = vld [vmem:[#allocation2 + $0xfd8] sm:$0xff]
    %v846 = vld [vmem:[#allocation2 + $0xfe0] sm:$0xff]
    %v847 = vld [vmem:[#allocation2 + $0xfe8] sm:$0xff]
    %v848 = vld [vmem:[#allocation2 + $0xff0] sm:$0xff]
    %v849 = vld [vmem:[#allocation2 + $0xff8] sm:$0xff]
    %v850 = vld [vmem:[#allocation2 + $0x1000] sm:$0xff]
    %v851 = vld [vmem:[#allocation2 + $0x1008] sm:$0xff]
    %v852 = vld [vmem:[#allocation2 + $0x1010] sm:$0xff]
    %v853 = vld [vmem:[#allocation2 + $0x1018] sm:$0xff]
    %v854 = vld [vmem:[#allocation2 + $0x1020] sm:$0xff]
    %v855 = vld [vmem:[#allocation2 + $0x1028] sm:$0xff]
    %v856 = vld [vmem:[#allocation2 + $0x1030] sm:$0xff]
    %v857 = vld [vmem:[#allocation2 + $0x1038] sm:$0xff]
    %v858 = vld [vmem:[#allocation2 + $0x1040] sm:$0xff]
    %v859 = vld [vmem:[#allocation2 + $0x1048] sm:$0xff]
    %v860 = vld [vmem:[#allocation2 + $0x1050] sm:$0xff]
    %v861 = vld [vmem:[#allocation2 + $0x1058] sm:$0xff]
    %v862 = vld [vmem:[#allocation2 + $0x1060] sm:$0xff]
    %v863 = vld [vmem:[#allocation2 + $0x1068] sm:$0xff]
    %v864 = vld [vmem:[#allocation2 + $0x1070] sm:$0xff]
    %v865 = vld [vmem:[#allocation2 + $0x1078] sm:$0xff]
    %v866 = vld [vmem:[#allocation2 + $0x1080] sm:$0xff]
    %v867 = vld [vmem:[#allocation2 + $0x1088] sm:$0xff]
    %v868 = vld [vmem:[#allocation2 + $0x1090] sm:$0xff]
    %v869 = vld [vmem:[#allocation2 + $0x1098] sm:$0xff]
    %v870 = vld [vmem:[#allocation2 + $0x10a0] sm:$0xff]
    %v871 = vld [vmem:[#allocation2 + $0x10a8] sm:$0xff]
    %v872 = vld [vmem:[#allocation2 + $0x10b0] sm:$0xff]
    %v873 = vld [vmem:[#allocation2 + $0x10b8] sm:$0xff]
    %v874 = vld [vmem:[#allocation2 + $0x10c0] sm:$0xff]
    %v875 = vld [vmem:[#allocation2 + $0x10c8] sm:$0xff]
    %v876 = vld [vmem:[#allocation2 + $0x10d0] sm:$0xff]
    %v877 = vld [vmem:[#allocation2 + $0x10d8] sm:$0xff]
    %v878 = vld [vmem:[#allocation2 + $0x10e0] sm:$0xff]
    %v879 = vld [vmem:[#allocation2 + $0x10e8] sm:$0xff]
    %v880 = vld [vmem:[#allocation2 + $0x10f0] sm:$0xff]
    %v881 = vld [vmem:[#allocation2 + $0x10f8] sm:$0xff]
    %v882 = vld [vmem:[#allocation2 + $0x1100] sm:$0xff]
    %v883 = vld [vmem:[#allocation2 + $0x1108] sm:$0xff]
    %v884 = vld [vmem:[#allocation2 + $0x1110] sm:$0xff]
    %v885 = vld [vmem:[#allocation2 + $0x1118] sm:$0xff]
    %v886 = vld [vmem:[#allocation2 + $0x1120] sm:$0xff]
    %v887 = vld [vmem:[#allocation2 + $0x1128] sm:$0xff]
    %v888 = vld [vmem:[#allocation2 + $0x1130] sm:$0xff]
    %v889 = vld [vmem:[#allocation2 + $0x1138] sm:$0xff]
    %v890 = vld [vmem:[#allocation2 + $0x1140] sm:$0xff]
    %v891 = vld [vmem:[#allocation2 + $0x1148] sm:$0xff]
    %v892 = vld [vmem:[#allocation2 + $0x1150] sm:$0xff]
    %v893 = vld [vmem:[#allocation2 + $0x1158] sm:$0xff]
    %v894 = vld [vmem:[#allocation2 + $0x1160] sm:$0xff]
    %v895 = vld [vmem:[#allocation2 + $0x1168] sm:$0xff]
    %v896 = vld [vmem:[#allocation2 + $0x1170] sm:$0xff]
    %v897 = vld [vmem:[#allocation2 + $0x1178] sm:$0xff]
    %v898 = vld [vmem:[#allocation2 + $0x1180] sm:$0xff]
    %v899 = vld [vmem:[#allocation2 + $0x1188] sm:$0xff]
    %v900 = vld [vmem:[#allocation2 + $0x1190] sm:$0xff]
    %v901 = vld [vmem:[#allocation2 + $0x1198] sm:$0xff]
    %v902 = vld [vmem:[#allocation2 + $0x11a0] sm:$0xff]
    %v903 = vld [vmem:[#allocation2 + $0x11a8] sm:$0xff]
    %v904 = vld [vmem:[#allocation2 + $0x11b0] sm:$0xff]
    %v905 = vld [vmem:[#allocation2 + $0x11b8] sm:$0xff]
    %v906 = vld [vmem:[#allocation2 + $0x11c0] sm:$0xff]
    %v907 = vld [vmem:[#allocation2 + $0x11c8] sm:$0xff]
    %v908 = vld [vmem:[#allocation2 + $0x11d0] sm:$0xff]
    %v909 = vld [vmem:[#allocation2 + $0x11d8] sm:$0xff]
    %v910 = vld [vmem:[#allocation2 + $0x11e0] sm:$0xff]
    %v911 = vld [vmem:[#allocation2 + $0x11e8] sm:$0xff]
    %v912 = vld [vmem:[#allocation2 + $0x11f0] sm:$0xff]
    %v913 = vld [vmem:[#allocation2 + $0x11f8] sm:$0xff]
    %v914 = vld [vmem:[#allocation2 + $0x1200] sm:$0xff]
    %v915 = vld [vmem:[#allocation2 + $0x1208] sm:$0xff]
    %v916 = vld [vmem:[#allocation2 + $0x1210] sm:$0xff]
    %v917 = vld [vmem:[#allocation2 + $0x1218] sm:$0xff]
    %v918 = vld [vmem:[#allocation2 + $0x1220] sm:$0xff]
    %v919 = vld [vmem:[#allocation2 + $0x1228] sm:$0xff]
    %v920 = vld [vmem:[#allocation2 + $0x1230] sm:$0xff]
    %v921 = vld [vmem:[#allocation2 + $0x1238] sm:$0xff]
    %v922 = vld [vmem:[#allocation2 + $0x1240] sm:$0xff]
    %v923 = vld [vmem:[#allocation2 + $0x1248] sm:$0xff]
    %v924 = vld [vmem:[#allocation2 + $0x1250] sm:$0xff]
    %v925 = vld [vmem:[#allocation2 + $0x1258] sm:$0xff]
    %v926 = vld [vmem:[#allocation2 + $0x1260] sm:$0xff]
    %v927 = vld [vmem:[#allocation2 + $0x1268] sm:$0xff]
    %v928 = vld [vmem:[#allocation2 + $0x1270] sm:$0xff]
    %v929 = vld [vmem:[#allocation2 + $0x1278] sm:$0xff]
    %v930 = vld [vmem:[#allocation2 + $0x1280] sm:$0xff]
    %v931 = vld [vmem:[#allocation2 + $0x1288] sm:$0xff]
    %v932 = vld [vmem:[#allocation2 + $0x1290] sm:$0xff]
    %v933 = vld [vmem:[#allocation2 + $0x1298] sm:$0xff]
    %v934 = vld [vmem:[#allocation2 + $0x12a0] sm:$0xff]
    %v935 = vld [vmem:[#allocation2 + $0x12a8] sm:$0xff]
    %v936 = vld [vmem:[#allocation2 + $0x12b0] sm:$0xff]
    %v937 = vld [vmem:[#allocation2 + $0x12b8] sm:$0xff]
    %s938 = scalar_lea.vmem [#allocation2], 4800
    %v939 = vld [vmem:[%s938] ss:$8 sm:$0xf]
    %v940 = vld [vmem:[%s938] ss:$8 sm:$0xf0]
    %v941 = vor.u32 %v939, %v940
    %v943 = vlaneseq
    %v944 = vshrl.u32 %v943, 7
    %v945 = vsub.s32 0, %v944
    %v946 = vrot.slane %v941, %v945
    %v947 = vlaneseq
    %v948 = vshrl.u32 %v947, 7
    %v949 = vsub.s32 1, %v948
    %v950 = vrot.slane %v941, %v949
    %v951 = vlaneseq
    %v952 = vshrl.u32 %v951, 7
    %v953 = vsub.s32 2, %v952
    %v954 = vrot.slane %v941, %v953
    %v955 = vlaneseq
    %v956 = vshrl.u32 %v955, 7
    %v957 = vsub.s32 3, %v956
    %v958 = vrot.slane %v941, %v957
    %v959 = vlaneseq
    %v960 = vshrl.u32 %v959, 7
    %v961 = vsub.s32 4, %v960
    %v962 = vrot.slane %v941, %v961
    %v963 = vlaneseq
    %v964 = vshrl.u32 %v963, 7
    %v965 = vsub.s32 5, %v964
    %v966 = vrot.slane %v941, %v965
    %v967 = vlaneseq
    %v968 = vshrl.u32 %v967, 7
    %v969 = vsub.s32 6, %v968
    %v970 = vrot.slane %v941, %v969
    %v971 = vlaneseq
    %v972 = vshrl.u32 %v971, 7
    %v973 = vsub.s32 7, %v972
    %v974 = vrot.slane %v941, %v973
    %vm983 = vcmask 523264
    %v985 = vsel %vm983, %v617, 0
    %987 = vmatprep.subr.mxu0 %v619
    %988 = vmatpush1.msra.mxu0 %v618
    %989 = vmatprep.subr.mxu0 %v627
    %990 = vmatpush1.msra.mxu0 %v626
    %991 = vmatprep.subr.mxu0 %v635
    %992 = vmatpush1.msra.mxu0 %v634
    %993 = vmatprep.subr.mxu0 %v643
    %994 = vmatpush1.msra.mxu0 %v642
    %995 = vmatprep.subr.mxu0 %v651
    %996 = vmatpush1.msra.mxu0 %v650
    %997 = vmatprep.subr.mxu0 %v659
    %998 = vmatpush1.msra.mxu0 %v658
    %999 = vmatprep.subr.mxu0 %v667
    %1000 = vmatpush1.msra.mxu0 %v666
    %1001 = vmatprep.subr.mxu0 %v675
    %1002 = vmatpush1.msra.mxu0 %v674
    %1003 = vmatprep.subr.mxu0 %v683
    %1004 = vmatpush1.msra.mxu0 %v682
    %1005 = vmatprep.subr.mxu0 %v691
    %1006 = vmatpush1.msra.mxu0 %v690
    %1007 = vmatprep.subr.mxu0 %v699
    %1008 = vmatpush1.msra.mxu0 %v698
    %1009 = vmatprep.subr.mxu0 %v707
    %1010 = vmatpush1.msra.mxu0 %v706
    %1011 = vmatprep.subr.mxu0 %v715
    %1012 = vmatpush1.msra.mxu0 %v714
    %1013 = vmatprep.subr.mxu0 %v723
    %1014 = vmatpush1.msra.mxu0 %v722
    %1015 = vmatprep.subr.mxu0 %v731
    %1016 = vmatpush1.msra.mxu0 %v730
    %1017 = vmatprep.subr.mxu0 %v739
    %1018 = vmatpush1.msra.mxu0 %v738
    %1019 = vmatprep.subr.mxu0 %v747
    %1020 = vmatpush1.msra.mxu0 %v746
    %1021 = vmatprep.subr.mxu0 %v755
    %1022 = vmatpush1.msra.mxu0 %v754
    %1023 = vmatprep.subr.mxu0 %v763
    %1024 = vmatpush1.msra.mxu0 %v762
    %1025 = vmatprep.subr.mxu0 %v771
    %1026 = vmatpush1.msra.mxu0 %v770
    %1027 = vmatprep.subr.mxu0 %v779
    %1028 = vmatpush1.msra.mxu0 %v778
    %1029 = vmatprep.subr.mxu0 %v787
    %1030 = vmatpush1.msra.mxu0 %v786
    %1031 = vmatprep.subr.mxu0 %v795
    %1032 = vmatpush1.msra.mxu0 %v794
    %1033 = vmatprep.subr.mxu0 %v803
    %1034 = vmatpush1.msra.mxu0 %v802
    %1035 = vmatprep.subr.mxu0 %v811
    %1036 = vmatpush1.msra.mxu0 %v810
    %1037 = vmatprep.subr.mxu0 %v819
    %1038 = vmatpush1.msra.mxu0 %v818
    %1039 = vmatprep.subr.mxu0 %v827
    %1040 = vmatpush1.msra.mxu0 %v826
    %1041 = vmatprep.subr.mxu0 %v835
    %1042 = vmatpush1.msra.mxu0 %v834
    %1043 = vmatprep.subr.mxu0 %v843
    %1044 = vmatpush1.msra.mxu0 %v842
    %1045 = vmatprep.subr.mxu0 %v851
    %1046 = vmatpush1.msra.mxu0 %v850
    %1047 = vmatprep.subr.mxu0 %v859
    %1048 = vmatpush1.msra.mxu0 %v858
    %1049 = vmatprep.subr.mxu0 %v867
    %1050 = vmatpush1.msra.mxu0 %v866
    %1051 = vmatprep.mubr.f32.mxu0 %v616
    %1052 = vmatmul.mubr.f32.gmra.mrb[0].mxu0 %v615
    %v1053 = vpop.f32.mrb[0].mxu0
    %v1054 = vadd.f32 %v946, %v1053
    %v1055 = vpop.f32.mrb[0].mxu0
    %v1056 = vadd.f32 %v950, %v1055
    %1057 = vdwg.mxu0
    %1058 = vmatprep.subr.mxu0 %v875
    %1059 = vmatpush1.msra.mxu0 %v874
    %1060 = vmatprep.subr.mxu0 %v883
    %1061 = vmatpush1.msra.mxu0 %v882
    %1062 = vmatprep.subr.mxu0 %v891
    %1063 = vmatpush1.msra.mxu0 %v890
    %1064 = vmatprep.subr.mxu0 %v899
    %1065 = vmatpush1.msra.mxu0 %v898
    %1066 = vmatprep.subr.mxu0 %v907
    %1067 = vmatpush1.msra.mxu0 %v906
    %1068 = vmatprep.subr.mxu0 %v915
    %1069 = vmatpush1.msra.mxu0 %v914
    %1070 = vmatprep.subr.mxu0 %v923
    %1071 = vmatpush1.msra.mxu0 %v922
    %1072 = vmatprep.subr.mxu0 %v931
    %1073 = vmatpush1.msra.mxu0 %v930
    %1074 = vmatprep.subr.mxu0 0.0
    %1075 = vmatpush1.msra.mxu0 0.0
    %1076 = vmatprep.subr.mxu0 0.0
    %1077 = vmatpush1.msra.mxu0 0.0
    %1078 = vmatprep.subr.mxu0 0.0
    %1079 = vmatpush1.msra.mxu0 0.0
    %1080 = vmatprep.subr.mxu0 0.0
    %1081 = vmatpush1.msra.mxu0 0.0
    %1082 = vmatprep.subr.mxu0 0.0
    %1083 = vmatpush1.msra.mxu0 0.0
    %1084 = vmatprep.subr.mxu0 0.0
    %1085 = vmatpush1.msra.mxu0 0.0
    %1086 = vmatprep.subr.mxu0 0.0
    %1087 = vmatpush1.msra.mxu0 0.0
    %1088 = vmatprep.subr.mxu0 0.0
    %1089 = vmatpush1.msra.mxu0 0.0
    %1090 = vmatprep.subr.mxu0 0.0
    %1091 = vmatpush1.msra.mxu0 0.0
    %1092 = vmatprep.subr.mxu0 0.0
    %1093 = vmatpush1.msra.mxu0 0.0
    %1094 = vmatprep.subr.mxu0 0.0
    %1095 = vmatpush1.msra.mxu0 0.0
    %1096 = vmatprep.subr.mxu0 0.0
    %1097 = vmatpush1.msra.mxu0 0.0
    %1098 = vmatprep.subr.mxu0 0.0
    %1099 = vmatpush1.msra.mxu0 0.0
    %1100 = vmatprep.subr.mxu0 0.0
    %1101 = vmatpush1.msra.mxu0 0.0
    %1102 = vmatprep.subr.mxu0 0.0
    %1103 = vmatpush1.msra.mxu0 0.0
    %1104 = vmatprep.subr.mxu0 0.0
    %1105 = vmatpush1.msra.mxu0 0.0
    %1106 = vmatprep.subr.mxu0 0.0
    %1107 = vmatpush1.msra.mxu0 0.0
    %1108 = vmatprep.subr.mxu0 0.0
    %1109 = vmatpush1.msra.mxu0 0.0
    %1110 = vmatprep.subr.mxu0 0.0
    %1111 = vmatpush1.msra.mxu0 0.0
    %1112 = vmatprep.subr.mxu0 0.0
    %1113 = vmatpush1.msra.mxu0 0.0
    %1114 = vmatprep.subr.mxu0 0.0
    %1115 = vmatpush1.msra.mxu0 0.0
    %1116 = vmatprep.subr.mxu0 0.0
    %1117 = vmatpush1.msra.mxu0 0.0
    %1118 = vmatprep.subr.mxu0 0.0
    %1119 = vmatpush1.msra.mxu0 0.0
    %1120 = vmatprep.subr.mxu0 0.0
    %1121 = vmatpush1.msra.mxu0 0.0
    %1122 = vmatprep.mubr.f32.mxu0 0.0
    %1123 = vmatmul.mubr.f32.gmra.mrb[0].mxu0 %v985
    %v1124 = vpop.f32.mrb[0].mxu0
    %v1125 = vadd.f32 %v1054, %v1124
    %v1126 = vpop.f32.mrb[0].mxu0
    %v1127 = vadd.f32 %v1056, %v1126
    %1128 = vdwg.mxu0
    %1129 = vmatprep.subr.mxu0 %v621
    %1130 = vmatpush1.msra.mxu0 %v620
    %1131 = vmatprep.subr.mxu0 %v629
    %1132 = vmatpush1.msra.mxu0 %v628
    %1133 = vmatprep.subr.mxu0 %v637
    %1134 = vmatpush1.msra.mxu0 %v636
    %1135 = vmatprep.subr.mxu0 %v645
    %1136 = vmatpush1.msra.mxu0 %v644
    %1137 = vmatprep.subr.mxu0 %v653
    %1138 = vmatpush1.msra.mxu0 %v652
    %1139 = vmatprep.subr.mxu0 %v661
    %1140 = vmatpush1.msra.mxu0 %v660
    %1141 = vmatprep.subr.mxu0 %v669
    %1142 = vmatpush1.msra.mxu0 %v668
    %1143 = vmatprep.subr.mxu0 %v677
    %1144 = vmatpush1.msra.mxu0 %v676
    %1145 = vmatprep.subr.mxu0 %v685
    %1146 = vmatpush1.msra.mxu0 %v684
    %1147 = vmatprep.subr.mxu0 %v693
    %1148 = vmatpush1.msra.mxu0 %v692
    %1149 = vmatprep.subr.mxu0 %v701
    %1150 = vmatpush1.msra.mxu0 %v700
    %1151 = vmatprep.subr.mxu0 %v709
    %1152 = vmatpush1.msra.mxu0 %v708
    %1153 = vmatprep.subr.mxu0 %v717
    %1154 = vmatpush1.msra.mxu0 %v716
    %1155 = vmatprep.subr.mxu0 %v725
    %1156 = vmatpush1.msra.mxu0 %v724
    %1157 = vmatprep.subr.mxu0 %v733
    %1158 = vmatpush1.msra.mxu0 %v732
    %1159 = vmatprep.subr.mxu0 %v741
    %1160 = vmatpush1.msra.mxu0 %v740
    %1161 = vmatprep.subr.mxu0 %v749
    %1162 = vmatpush1.msra.mxu0 %v748
    %1163 = vmatprep.subr.mxu0 %v757
    %1164 = vmatpush1.msra.mxu0 %v756
    %1165 = vmatprep.subr.mxu0 %v765
    %1166 = vmatpush1.msra.mxu0 %v764
    %1167 = vmatprep.subr.mxu0 %v773
    %1168 = vmatpush1.msra.mxu0 %v772
    %1169 = vmatprep.subr.mxu0 %v781
    %1170 = vmatpush1.msra.mxu0 %v780
    %1171 = vmatprep.subr.mxu0 %v789
    %1172 = vmatpush1.msra.mxu0 %v788
    %1173 = vmatprep.subr.mxu0 %v797
    %1174 = vmatpush1.msra.mxu0 %v796
    %1175 = vmatprep.subr.mxu0 %v805
    %1176 = vmatpush1.msra.mxu0 %v804
    %1177 = vmatprep.subr.mxu0 %v813
    %1178 = vmatpush1.msra.mxu0 %v812
    %1179 = vmatprep.subr.mxu0 %v821
    %1180 = vmatpush1.msra.mxu0 %v820
    %1181 = vmatprep.subr.mxu0 %v829
    %1182 = vmatpush1.msra.mxu0 %v828
    %1183 = vmatprep.subr.mxu0 %v837
    %1184 = vmatpush1.msra.mxu0 %v836
    %1185 = vmatprep.subr.mxu0 %v845
    %1186 = vmatpush1.msra.mxu0 %v844
    %1187 = vmatprep.subr.mxu0 %v853
    %1188 = vmatpush1.msra.mxu0 %v852
    %1189 = vmatprep.subr.mxu0 %v861
    %1190 = vmatpush1.msra.mxu0 %v860
    %1191 = vmatprep.subr.mxu0 %v869
    %1192 = vmatpush1.msra.mxu0 %v868
    %1193 = vmatprep.mubr.f32.mxu0 %v616
    %1194 = vmatmul.mubr.f32.gmra.mrb[0].mxu0 %v615
    %v1195 = vpop.f32.mrb[0].mxu0
    %v1196 = vadd.f32 %v954, %v1195
    %v1197 = vpop.f32.mrb[0].mxu0
    %v1198 = vadd.f32 %v958, %v1197
    %1199 = vdwg.mxu0
    %1200 = vmatprep.subr.mxu0 %v877
    %1201 = vmatpush1.msra.mxu0 %v876
    %1202 = vmatprep.subr.mxu0 %v885
    %1203 = vmatpush1.msra.mxu0 %v884
    %1204 = vmatprep.subr.mxu0 %v893
    %1205 = vmatpush1.msra.mxu0 %v892
    %1206 = vmatprep.subr.mxu0 %v901
    %1207 = vmatpush1.msra.mxu0 %v900
    %1208 = vmatprep.subr.mxu0 %v909
    %1209 = vmatpush1.msra.mxu0 %v908
    %1210 = vmatprep.subr.mxu0 %v917
    %1211 = vmatpush1.msra.mxu0 %v916
    %1212 = vmatprep.subr.mxu0 %v925
    %1213 = vmatpush1.msra.mxu0 %v924
    %1214 = vmatprep.subr.mxu0 %v933
    %1215 = vmatpush1.msra.mxu0 %v932
    %1216 = vmatprep.subr.mxu0 0.0
    %1217 = vmatpush1.msra.mxu0 0.0
    %1218 = vmatprep.subr.mxu0 0.0
    %1219 = vmatpush1.msra.mxu0 0.0
    %1220 = vmatprep.subr.mxu0 0.0
    %1221 = vmatpush1.msra.mxu0 0.0
    %1222 = vmatprep.subr.mxu0 0.0
    %1223 = vmatpush1.msra.mxu0 0.0
    %1224 = vmatprep.subr.mxu0 0.0
    %1225 = vmatpush1.msra.mxu0 0.0
    %1226 = vmatprep.subr.mxu0 0.0
    %1227 = vmatpush1.msra.mxu0 0.0
    %1228 = vmatprep.subr.mxu0 0.0
    %1229 = vmatpush1.msra.mxu0 0.0
    %1230 = vmatprep.subr.mxu0 0.0
    %1231 = vmatpush1.msra.mxu0 0.0
    %1232 = vmatprep.subr.mxu0 0.0
    %1233 = vmatpush1.msra.mxu0 0.0
    %1234 = vmatprep.subr.mxu0 0.0
    %1235 = vmatpush1.msra.mxu0 0.0
    %1236 = vmatprep.subr.mxu0 0.0
    %1237 = vmatpush1.msra.mxu0 0.0
    %1238 = vmatprep.subr.mxu0 0.0
    %1239 = vmatpush1.msra.mxu0 0.0
    %1240 = vmatprep.subr.mxu0 0.0
    %1241 = vmatpush1.msra.mxu0 0.0
    %1242 = vmatprep.subr.mxu0 0.0
    %1243 = vmatpush1.msra.mxu0 0.0
    %1244 = vmatprep.subr.mxu0 0.0
    %1245 = vmatpush1.msra.mxu0 0.0
    %1246 = vmatprep.subr.mxu0 0.0
    %1247 = vmatpush1.msra.mxu0 0.0
    %1248 = vmatprep.subr.mxu0 0.0
    %1249 = vmatpush1.msra.mxu0 0.0
    %1250 = vmatprep.subr.mxu0 0.0
    %1251 = vmatpush1.msra.mxu0 0.0
    %1252 = vmatprep.subr.mxu0 0.0
    %1253 = vmatpush1.msra.mxu0 0.0
    %1254 = vmatprep.subr.mxu0 0.0
    %1255 = vmatpush1.msra.mxu0 0.0
    %1256 = vmatprep.subr.mxu0 0.0
    %1257 = vmatpush1.msra.mxu0 0.0
    %1258 = vmatprep.subr.mxu0 0.0
    %1259 = vmatpush1.msra.mxu0 0.0
    %1260 = vmatprep.subr.mxu0 0.0
    %1261 = vmatpush1.msra.mxu0 0.0
    %1262 = vmatprep.subr.mxu0 0.0
    %1263 = vmatpush1.msra.mxu0 0.0
    %1264 = vmatprep.mubr.f32.mxu0 0.0
    %1265 = vmatmul.mubr.f32.gmra.mrb[0].mxu0 %v985
    %v1266 = vpop.f32.mrb[0].mxu0
    %v1267 = vadd.f32 %v1196, %v1266
    %v1268 = vpop.f32.mrb[0].mxu0
    %v1269 = vadd.f32 %v1198, %v1268
    %1270 = vdwg.mxu0
    %1271 = vmatprep.subr.mxu0 %v623
    %1272 = vmatpush1.msra.mxu0 %v622
    %1273 = vmatprep.subr.mxu0 %v631
    %1274 = vmatpush1.msra.mxu0 %v630
    %1275 = vmatprep.subr.mxu0 %v639
    %1276 = vmatpush1.msra.mxu0 %v638
    %1277 = vmatprep.subr.mxu0 %v647
    %1278 = vmatpush1.msra.mxu0 %v646
    %1279 = vmatprep.subr.mxu0 %v655
    %1280 = vmatpush1.msra.mxu0 %v654
    %1281 = vmatprep.subr.mxu0 %v663
    %1282 = vmatpush1.msra.mxu0 %v662
    %1283 = vmatprep.subr.mxu0 %v671
    %1284 = vmatpush1.msra.mxu0 %v670
    %1285 = vmatprep.subr.mxu0 %v679
    %1286 = vmatpush1.msra.mxu0 %v678
    %1287 = vmatprep.subr.mxu0 %v687
    %1288 = vmatpush1.msra.mxu0 %v686
    %1289 = vmatprep.subr.mxu0 %v695
    %1290 = vmatpush1.msra.mxu0 %v694
    %1291 = vmatprep.subr.mxu0 %v703
    %1292 = vmatpush1.msra.mxu0 %v702
    %1293 = vmatprep.subr.mxu0 %v711
    %1294 = vmatpush1.msra.mxu0 %v710
    %1295 = vmatprep.subr.mxu0 %v719
    %1296 = vmatpush1.msra.mxu0 %v718
    %1297 = vmatprep.subr.mxu0 %v727
    %1298 = vmatpush1.msra.mxu0 %v726
    %1299 = vmatprep.subr.mxu0 %v735
    %1300 = vmatpush1.msra.mxu0 %v734
    %1301 = vmatprep.subr.mxu0 %v743
    %1302 = vmatpush1.msra.mxu0 %v742
    %1303 = vmatprep.subr.mxu0 %v751
    %1304 = vmatpush1.msra.mxu0 %v750
    %1305 = vmatprep.subr.mxu0 %v759
    %1306 = vmatpush1.msra.mxu0 %v758
    %1307 = vmatprep.subr.mxu0 %v767
    %1308 = vmatpush1.msra.mxu0 %v766
    %1309 = vmatprep.subr.mxu0 %v775
    %1310 = vmatpush1.msra.mxu0 %v774
    %1311 = vmatprep.subr.mxu0 %v783
    %1312 = vmatpush1.msra.mxu0 %v782
    %1313 = vmatprep.subr.mxu0 %v791
    %1314 = vmatpush1.msra.mxu0 %v790
    %1315 = vmatprep.subr.mxu0 %v799
    %1316 = vmatpush1.msra.mxu0 %v798
    %1317 = vmatprep.subr.mxu0 %v807
    %1318 = vmatpush1.msra.mxu0 %v806
    %1319 = vmatprep.subr.mxu0 %v815
    %1320 = vmatpush1.msra.mxu0 %v814
    %1321 = vmatprep.subr.mxu0 %v823
    %1322 = vmatpush1.msra.mxu0 %v822
    %1323 = vmatprep.subr.mxu0 %v831
    %1324 = vmatpush1.msra.mxu0 %v830
    %1325 = vmatprep.subr.mxu0 %v839
    %1326 = vmatpush1.msra.mxu0 %v838
    %1327 = vmatprep.subr.mxu0 %v847
    %1328 = vmatpush1.msra.mxu0 %v846
    %1329 = vmatprep.subr.mxu0 %v855
    %1330 = vmatpush1.msra.mxu0 %v854
    %1331 = vmatprep.subr.mxu0 %v863
    %1332 = vmatpush1.msra.mxu0 %v862
    %1333 = vmatprep.subr.mxu0 %v871
    %1334 = vmatpush1.msra.mxu0 %v870
    %1335 = vmatprep.mubr.f32.mxu0 %v616
    %1336 = vmatmul.mubr.f32.gmra.mrb[0].mxu0 %v615
    %v1337 = vpop.f32.mrb[0].mxu0
    %v1338 = vadd.f32 %v962, %v1337
    %v1339 = vpop.f32.mrb[0].mxu0
    %v1340 = vadd.f32 %v966, %v1339
    %1341 = vdwg.mxu0
    %1342 = vmatprep.subr.mxu0 %v879
    %1343 = vmatpush1.msra.mxu0 %v878
    %1344 = vmatprep.subr.mxu0 %v887
    %1345 = vmatpush1.msra.mxu0 %v886
    %1346 = vmatprep.subr.mxu0 %v895
    %1347 = vmatpush1.msra.mxu0 %v894
    %1348 = vmatprep.subr.mxu0 %v903
    %1349 = vmatpush1.msra.mxu0 %v902
    %1350 = vmatprep.subr.mxu0 %v911
    %1351 = vmatpush1.msra.mxu0 %v910
    %1352 = vmatprep.subr.mxu0 %v919
    %1353 = vmatpush1.msra.mxu0 %v918
    %1354 = vmatprep.subr.mxu0 %v927
    %1355 = vmatpush1.msra.mxu0 %v926
    %1356 = vmatprep.subr.mxu0 %v935
    %1357 = vmatpush1.msra.mxu0 %v934
    %1358 = vmatprep.subr.mxu0 0.0
    %1359 = vmatpush1.msra.mxu0 0.0
    %1360 = vmatprep.subr.mxu0 0.0
    %1361 = vmatpush1.msra.mxu0 0.0
    %1362 = vmatprep.subr.mxu0 0.0
    %1363 = vmatpush1.msra.mxu0 0.0
    %1364 = vmatprep.subr.mxu0 0.0
    %1365 = vmatpush1.msra.mxu0 0.0
    %1366 = vmatprep.subr.mxu0 0.0
    %1367 = vmatpush1.msra.mxu0 0.0
    %1368 = vmatprep.subr.mxu0 0.0
    %1369 = vmatpush1.msra.mxu0 0.0
    %1370 = vmatprep.subr.mxu0 0.0
    %1371 = vmatpush1.msra.mxu0 0.0
    %1372 = vmatprep.subr.mxu0 0.0
    %1373 = vmatpush1.msra.mxu0 0.0
    %1374 = vmatprep.subr.mxu0 0.0
    %1375 = vmatpush1.msra.mxu0 0.0
    %1376 = vmatprep.subr.mxu0 0.0
    %1377 = vmatpush1.msra.mxu0 0.0
    %1378 = vmatprep.subr.mxu0 0.0
    %1379 = vmatpush1.msra.mxu0 0.0
    %1380 = vmatprep.subr.mxu0 0.0
    %1381 = vmatpush1.msra.mxu0 0.0
    %1382 = vmatprep.subr.mxu0 0.0
    %1383 = vmatpush1.msra.mxu0 0.0
    %1384 = vmatprep.subr.mxu0 0.0
    %1385 = vmatpush1.msra.mxu0 0.0
    %1386 = vmatprep.subr.mxu0 0.0
    %1387 = vmatpush1.msra.mxu0 0.0
    %1388 = vmatprep.subr.mxu0 0.0
    %1389 = vmatpush1.msra.mxu0 0.0
    %1390 = vmatprep.subr.mxu0 0.0
    %1391 = vmatpush1.msra.mxu0 0.0
    %1392 = vmatprep.subr.mxu0 0.0
    %1393 = vmatpush1.msra.mxu0 0.0
    %1394 = vmatprep.subr.mxu0 0.0
    %1395 = vmatpush1.msra.mxu0 0.0
    %1396 = vmatprep.subr.mxu0 0.0
    %1397 = vmatpush1.msra.mxu0 0.0
    %1398 = vmatprep.subr.mxu0 0.0
    %1399 = vmatpush1.msra.mxu0 0.0
    %1400 = vmatprep.subr.mxu0 0.0
    %1401 = vmatpush1.msra.mxu0 0.0
    %1402 = vmatprep.subr.mxu0 0.0
    %1403 = vmatpush1.msra.mxu0 0.0
    %1404 = vmatprep.subr.mxu0 0.0
    %1405 = vmatpush1.msra.mxu0 0.0
    %1406 = vmatprep.mubr.f32.mxu0 0.0
    %1407 = vmatmul.mubr.f32.gmra.mrb[0].mxu0 %v985
    %v1408 = vpop.f32.mrb[0].mxu0
    %v1409 = vadd.f32 %v1338, %v1408
    %v1410 = vpop.f32.mrb[0].mxu0
    %v1411 = vadd.f32 %v1340, %v1410
    %1412 = vdwg.mxu0
    %1413 = vmatprep.subr.mxu0 %v625
    %1414 = vmatpush1.msra.mxu0 %v624
    %1415 = vmatprep.subr.mxu0 %v633
    %1416 = vmatpush1.msra.mxu0 %v632
    %1417 = vmatprep.subr.mxu0 %v641
    %1418 = vmatpush1.msra.mxu0 %v640
    %1419 = vmatprep.subr.mxu0 %v649
    %1420 = vmatpush1.msra.mxu0 %v648
    %1421 = vmatprep.subr.mxu0 %v657
    %1422 = vmatpush1.msra.mxu0 %v656
    %1423 = vmatprep.subr.mxu0 %v665
    %1424 = vmatpush1.msra.mxu0 %v664
    %1425 = vmatprep.subr.mxu0 %v673
    %1426 = vmatpush1.msra.mxu0 %v672
    %1427 = vmatprep.subr.mxu0 %v681
    %1428 = vmatpush1.msra.mxu0 %v680
    %1429 = vmatprep.subr.mxu0 %v689
    %1430 = vmatpush1.msra.mxu0 %v688
    %1431 = vmatprep.subr.mxu0 %v697
    %1432 = vmatpush1.msra.mxu0 %v696
    %1433 = vmatprep.subr.mxu0 %v705
    %1434 = vmatpush1.msra.mxu0 %v704
    %1435 = vmatprep.subr.mxu0 %v713
    %1436 = vmatpush1.msra.mxu0 %v712
    %1437 = vmatprep.subr.mxu0 %v721
    %1438 = vmatpush1.msra.mxu0 %v720
    %1439 = vmatprep.subr.mxu0 %v729
    %1440 = vmatpush1.msra.mxu0 %v728
    %1441 = vmatprep.subr.mxu0 %v737
    %1442 = vmatpush1.msra.mxu0 %v736
    %1443 = vmatprep.subr.mxu0 %v745
    %1444 = vmatpush1.msra.mxu0 %v744
    %1445 = vmatprep.subr.mxu0 %v753
    %1446 = vmatpush1.msra.mxu0 %v752
    %1447 = vmatprep.subr.mxu0 %v761
    %1448 = vmatpush1.msra.mxu0 %v760
    %1449 = vmatprep.subr.mxu0 %v769
    %1450 = vmatpush1.msra.mxu0 %v768
    %1451 = vmatprep.subr.mxu0 %v777
    %1452 = vmatpush1.msra.mxu0 %v776
    %1453 = vmatprep.subr.mxu0 %v785
    %1454 = vmatpush1.msra.mxu0 %v784
    %1455 = vmatprep.subr.mxu0 %v793
    %1456 = vmatpush1.msra.mxu0 %v792
    %1457 = vmatprep.subr.mxu0 %v801
    %1458 = vmatpush1.msra.mxu0 %v800
    %1459 = vmatprep.subr.mxu0 %v809
    %1460 = vmatpush1.msra.mxu0 %v808
    %1461 = vmatprep.subr.mxu0 %v817
    %1462 = vmatpush1.msra.mxu0 %v816
    %1463 = vmatprep.subr.mxu0 %v825
    %1464 = vmatpush1.msra.mxu0 %v824
    %1465 = vmatprep.subr.mxu0 %v833
    %1466 = vmatpush1.msra.mxu0 %v832
    %1467 = vmatprep.subr.mxu0 %v841
    %1468 = vmatpush1.msra.mxu0 %v840
    %1469 = vmatprep.subr.mxu0 %v849
    %1470 = vmatpush1.msra.mxu0 %v848
    %1471 = vmatprep.subr.mxu0 %v857
    %1472 = vmatpush1.msra.mxu0 %v856
    %1473 = vmatprep.subr.mxu0 %v865
    %1474 = vmatpush1.msra.mxu0 %v864
    %1475 = vmatprep.subr.mxu0 %v873
    %1476 = vmatpush1.msra.mxu0 %v872
    %1477 = vmatprep.mubr.f32.mxu0 %v616
    %1478 = vmatmul.mubr.f32.gmra.mrb[0].mxu0 %v615
    %v1479 = vpop.f32.mrb[0].mxu0
    %v1480 = vadd.f32 %v970, %v1479
    %v1481 = vpop.f32.mrb[0].mxu0
    %v1482 = vadd.f32 %v974, %v1481
    %1483 = vdwg.mxu0
    %1484 = vmatprep.subr.mxu0 %v881
    %1485 = vmatpush1.msra.mxu0 %v880
    %1486 = vmatprep.subr.mxu0 %v889
    %1487 = vmatpush1.msra.mxu0 %v888
    %1488 = vmatprep.subr.mxu0 %v897
    %1489 = vmatpush1.msra.mxu0 %v896
    %1490 = vmatprep.subr.mxu0 %v905
    %1491 = vmatpush1.msra.mxu0 %v904
    %1492 = vmatprep.subr.mxu0 %v913
    %1493 = vmatpush1.msra.mxu0 %v912
    %1494 = vmatprep.subr.mxu0 %v921
    %1495 = vmatpush1.msra.mxu0 %v920
    %1496 = vmatprep.subr.mxu0 %v929
    %1497 = vmatpush1.msra.mxu0 %v928
    %1498 = vmatprep.subr.mxu0 %v937
    %1499 = vmatpush1.msra.mxu0 %v936
    %1500 = vmatprep.subr.mxu0 0.0
    %1501 = vmatpush1.msra.mxu0 0.0
    %1502 = vmatprep.subr.mxu0 0.0
    %1503 = vmatpush1.msra.mxu0 0.0
    %1504 = vmatprep.subr.mxu0 0.0
    %1505 = vmatpush1.msra.mxu0 0.0
    %1506 = vmatprep.subr.mxu0 0.0
    %1507 = vmatpush1.msra.mxu0 0.0
    %1508 = vmatprep.subr.mxu0 0.0
    %1509 = vmatpush1.msra.mxu0 0.0
    %1510 = vmatprep.subr.mxu0 0.0
    %1511 = vmatpush1.msra.mxu0 0.0
    %1512 = vmatprep.subr.mxu0 0.0
    %1513 = vmatpush1.msra.mxu0 0.0
    %1514 = vmatprep.subr.mxu0 0.0
    %1515 = vmatpush1.msra.mxu0 0.0
    %1516 = vmatprep.subr.mxu0 0.0
    %1517 = vmatpush1.msra.mxu0 0.0
    %1518 = vmatprep.subr.mxu0 0.0
    %1519 = vmatpush1.msra.mxu0 0.0
    %1520 = vmatprep.subr.mxu0 0.0
    %1521 = vmatpush1.msra.mxu0 0.0
    %1522 = vmatprep.subr.mxu0 0.0
    %1523 = vmatpush1.msra.mxu0 0.0
    %1524 = vmatprep.subr.mxu0 0.0
    %1525 = vmatpush1.msra.mxu0 0.0
    %1526 = vmatprep.subr.mxu0 0.0
    %1527 = vmatpush1.msra.mxu0 0.0
    %1528 = vmatprep.subr.mxu0 0.0
    %1529 = vmatpush1.msra.mxu0 0.0
    %1530 = vmatprep.subr.mxu0 0.0
    %1531 = vmatpush1.msra.mxu0 0.0
    %1532 = vmatprep.subr.mxu0 0.0
    %1533 = vmatpush1.msra.mxu0 0.0
    %1534 = vmatprep.subr.mxu0 0.0
    %1535 = vmatpush1.msra.mxu0 0.0
    %1536 = vmatprep.subr.mxu0 0.0
    %1537 = vmatpush1.msra.mxu0 0.0
    %1538 = vmatprep.subr.mxu0 0.0
    %1539 = vmatpush1.msra.mxu0 0.0
    %1540 = vmatprep.subr.mxu0 0.0
    %1541 = vmatpush1.msra.mxu0 0.0
    %1542 = vmatprep.subr.mxu0 0.0
    %1543 = vmatpush1.msra.mxu0 0.0
    %1544 = vmatprep.subr.mxu0 0.0
    %1545 = vmatpush1.msra.mxu0 0.0
    %1546 = vmatprep.subr.mxu0 0.0
    %1547 = vmatpush1.msra.mxu0 0.0
    %1548 = vmatprep.mubr.f32.mxu0 0.0
    %1549 = vmatmul.mubr.f32.gmra.mrb[0].mxu0 %v985
    %v1550 = vpop.f32.mrb[0].mxu0
    %v1551 = vadd.f32 %v1480, %v1550
    %v1552 = vpop.f32.mrb[0].mxu0
    %v1553 = vadd.f32 %v1482, %v1552
    %1554 = vdwg.mxu0
    %v1563 = vcombine.low %v1125, %v1127
    %v1564 = vcombine.low %v1267, %v1269
    %v1565 = vcombine.low %v1409, %v1411
    %v1566 = vcombine.low %v1551, %v1553
    %1571 = vst [vmem:[%s2] sm:$0xff] %v1563
    %1572 = vst [vmem:[%s2 + $0x8] sm:$0xff] %v1564
    %1573 = vst [vmem:[%s2 + $0x10] sm:$0xff] %v1565
    %vm1574 = vcmask 523268
    %vm1575 = vmor %vm1574, %vm33
    %1576 = vst.msk [vmem:[%s2 + $0x18] sm:$0xff] %vm1575, %v1566
    // Predicated region
    $region14: #{forward.1} parent=1 // pred_check
      _
    $region15: #{forward.1} parent=1 // pred_check_branch
      %1578 = sbr.rel (0) target = $region17
    $region16: #{forward.1} parent=1 // pred_region
      _
    $region17: #{forward.1} parent=1 // pred_fallthru
      _
    // Predicated region
    $region18: #{forward.1} parent=1 // pred_check
      _
    $region19: #{forward.1} parent=1 // pred_check_branch
      %1580 = sbr.rel (0) target = $region21
    $region20: #{forward.1} parent=1 // pred_region
      _
    $region21: #{forward.1} parent=1 // pred_fallthru
      _
    %1581 = vsyncpa [#allocation3], 1

</llo_original>
